<compile_context>
chip_gen: v6e
topology: v6e:2x2x1
jax: 0.10.0
libtpu: 0.0.40
codegen_flags: <defaults>
</compile_context>

<pallas_src>
import jax
import jax.numpy as jnp
from jax.experimental import pallas as pl
from jax.experimental.pallas import tpu as pltpu


# -----------------------------------------------------------------------------
# Kernel: one batch tile per grid step, all weights resident in VMEM
# -----------------------------------------------------------------------------
def vae_kernel(
    x_ref,                  # [TB, 784]  matmul dtype (bf16)
    eps_ref,                # [TB, 10]   f32
    w1_ref, b1_ref,         # [784,256] mm, [1,256] f32
    w2_ref, b2_ref,         # [256, 64] mm, [1, 64] f32
    w3_ref, b3_ref,         # [ 64, 20] mm, [1, 20] f32   (fused mu|sigma head)
    wd1_ref, bd1_ref,       # [ 10, 64] mm, [1, 64] f32
    wd2_ref, bd2_ref,       # [ 64,256] mm, [1,256] f32
    wd3_ref, bd3_ref,       # [256,784] mm, [1,784] f32
    xhat_ref,               # out: [TB, 784] out_dtype (bf16 by default)
    kld_ref,                # out: [TB, 1]   f32 (unscaled per-row KLD sums)
):
    mm = w1_ref.dtype
    x = x_ref[...]

    # ---- encoder: Linear+ReLU x3 (f32 accumulation, f32 elementwise) ----------
    h1 = jnp.dot(x, w1_ref[...], preferred_element_type=jnp.float32) + b1_ref[...]
    h1 = jnp.maximum(h1, 0.0)
    h2 = jnp.dot(h1.astype(mm), w2_ref[...],
                 preferred_element_type=jnp.float32) + b2_ref[...]
    h2 = jnp.maximum(h2, 0.0)
    # fused encoder head: ReLU(h2 @ W3 + b3), then static lane-split into
    # mu / sigma (identical to the reference's ReLU(...).chunk(2, dim=1)).
    h3 = jnp.dot(h2.astype(mm), w3_ref[...],
                 preferred_element_type=jnp.float32) + b3_ref[...]
    h3 = jnp.maximum(h3, 0.0)                                   # [TB, 20]
    mu = h3[:, :10]                                             # [TB, 10]
    sigma = h3[:, 10:]                                          # [TB, 10]

    # ---- reparameterization: h = mu + sigma * eps (f32) -----------------------
    h = mu + sigma * eps_ref[...]                               # [TB, 10]

    # ---- decoder: Linear+ReLU, Linear+ReLU, Linear+Sigmoid --------------------
    d1 = jnp.dot(h.astype(mm), wd1_ref[...],
                 preferred_element_type=jnp.float32) + bd1_ref[...]
    d1 = jnp.maximum(d1, 0.0)
    d2 = jnp.dot(d1.astype(mm), wd2_ref[...],
                 preferred_element_type=jnp.float32) + bd2_ref[...]
    d2 = jnp.maximum(d2, 0.0)
    logits = jnp.dot(d2.astype(mm), wd3_ref[...],
                     preferred_element_type=jnp.float32) + bd3_ref[...]
    # sigmoid(z) = 1 / (1 + exp(-z)): exp on the EUP, approx reciprocal also on
    # the EUP slot (no VPU divide).  Output cast to the (bf16) store dtype.
    xhat = pl.reciprocal(1.0 + jnp.exp(-logits), approx=True)   # [TB, 784] f32
    xhat_ref[...] = xhat.astype(xhat_ref.dtype)

    # ---- per-row KLD partials (scaled & reduced outside the kernel) -----------
    # TODO(synk): could reduce to a single scalar per tile (masking padded rows)
    # to avoid the lane-sparse [TB,1] store; small volume, few-% win at most.
    s2 = sigma * sigma
    kld_ref[...] = jnp.sum(mu * mu + s2 - jnp.log(1e-8 + s2) - 1.0,
                           axis=1, keepdims=True)               # [TB, 1]


# -----------------------------------------------------------------------------
# Wrapper
# -----------------------------------------------------------------------------
_MAX_TILE_B = 1024  # ~16-20 MiB footprint at TB=1024 -> safe on v5e / v6e / v7x


def _round_up(x, m):
    return (x + m - 1) // m * m


def _choose_tile(b, align, max_tile_b):
    """Pick (tile_b, padded_b): tiles aligned to `align`, and when the whole
    batch would otherwise fit a single tile, split it so grid >= 2 and the
    'parallel' axis actually shards across both v7x TensorCores."""
    b_pad = _round_up(b, align)
    if b_pad <= max_tile_b:
        tb = max(align, _round_up(pl.cdiv(b_pad, 2), align))
    else:
        tb = max_tile_b
    b_pad = _round_up(b_pad, tb)
    return tb, b_pad


def vae_forward(x_nchw, params, eps, *, matmul_dtype=jnp.bfloat16,
                out_dtype=jnp.bfloat16, max_tile_b=_MAX_TILE_B):
    """x_nchw: [B, 1, 28, 28] f32; eps: [B, 10] f32 (~ randn_like(sigma)).

    Returns (x_hat [B, 1, 28, 28] out_dtype, kld scalar f32).
    """
    b = x_nchw.shape[0]
    x_flat = x_nchw.reshape(b, 784).astype(jnp.float32)
    eps = eps.astype(jnp.float32)

    (w1, b1), (w2, b2), (w3, b3), (wd1, bd1), (wd2, bd2), (wd3, bd3) = params

    # bf16 packs two rows per sublane -> align batch tiles to 16, else 8.
    align = 16 if matmul_dtype == jnp.bfloat16 else 8
    tb, b_pad = _choose_tile(b, align, max_tile_b)
    if b_pad != b:
        x_flat = jnp.pad(x_flat, ((0, b_pad - b), (0, 0)))
        eps = jnp.pad(eps, ((0, b_pad - b), (0, 0)))
    grid = (b_pad // tb,)

    x_in = x_flat.astype(matmul_dtype)

    weight_ops = []
    weight_specs = []
    weight_bytes = 0
    for w, bias in ((w1, b1), (w2, b2), (w3, b3),
                    (wd1, bd1), (wd2, bd2), (wd3, bd3)):
        wm = w.astype(matmul_dtype)
        bm = bias.reshape(1, -1).astype(jnp.float32)
        weight_ops += [wm, bm]
        weight_bytes += wm.size * wm.dtype.itemsize + bm.size * 4
        # Full-array blocks with constant index_map -> VMEM-resident params.
        # (pipeline_mode=pl.Buffered(1) would reclaim the duplicate buffers;
        #  skipped — VMEM is not the binding constraint here.)
        weight_specs += [pl.BlockSpec(wm.shape, lambda i: (0, 0)),
                         pl.BlockSpec(bm.shape, lambda i: (0, 0))]

    in_specs = [
        pl.BlockSpec((tb, 784), lambda i: (i, 0)),   # x tile
        pl.BlockSpec((tb, 10), lambda i: (i, 0)),    # eps tile
    ] + weight_specs

    out_specs = (
        pl.BlockSpec((tb, 784), lambda i: (i, 0)),   # x_hat tile
        pl.BlockSpec((tb, 1), lambda i: (i, 0)),     # per-row KLD partials
    )

    # Advisory cost estimate for XLA's scheduler around the custom call.
    mac = 784 * 256 + 256 * 64 + 64 * 20 + 10 * 64 + 64 * 256 + 256 * 784
    out_itemsize = jnp.dtype(out_dtype).itemsize
    cost = pl.CostEstimate(
        flops=2 * b_pad * mac,
        transcendentals=b_pad * (2 * 784 + 10),      # exp+recip per pixel, log/latent
        bytes_accessed=b_pad * (784 * jnp.dtype(matmul_dtype).itemsize
                                + 10 * 4 + 784 * out_itemsize + 4) + weight_bytes,
    )

    xhat_pad, kld_rows = pl.pallas_call(
        vae_kernel,
        grid=grid,
        out_shape=(
            jax.ShapeDtypeStruct((b_pad, 784), out_dtype),
            jax.ShapeDtypeStruct((b_pad, 1), jnp.float32),
        ),
        in_specs=in_specs,
        out_specs=out_specs,
        compiler_params=pltpu.CompilerParams(
            dimension_semantics=("parallel",),      # megacore sharding on v7x
            vmem_limit_bytes=64 * 1024 * 1024,
        ),
        cost_estimate=cost,
    )(x_in, eps, *weight_ops)

    x_hat = xhat_pad[:b].reshape(b, 1, 28, 28)
    kld = 0.5 * jnp.sum(kld_rows[:b, 0]) / jnp.float32(b * 28 * 28)
    return x_hat, kld


# -----------------------------------------------------------------------------
# Deterministic parameter init (PyTorch-like uniform(-1/sqrt(fan_in), +...))
# -----------------------------------------------------------------------------
def init_params(key):
    layer_dims = [
        (784, 256), (256, 64), (64, 20),   # encoder
        (10, 64), (64, 256), (256, 784),   # decoder
    ]
    params = []
    for (fan_in, fan_out) in layer_dims:
        key, kw, kb = jax.random.split(key, 3)
        bound = 1.0 / jnp.sqrt(jnp.float32(fan_in))
        w = jax.random.uniform(kw, (fan_in, fan_out), jnp.float32, -bound, bound)
        b = jax.random.uniform(kb, (fan_out,), jnp.float32, -bound, bound)
        params.append((w, b))
    return params, key


if __name__ == "__main__":
    key = jax.random.PRNGKey(0)
    params, key = init_params(key)

    key, kx, keps = jax.random.split(key, 3)
    batch = 8
    x = jax.random.uniform(kx, (batch, 1, 28, 28), jnp.float32)   # MNIST-like
    # TODO(synk): eps is generated host-side (jax.random) to match the reference
    # torch.randn_like RNG semantics; in-kernel pltpu.stateful_normal would
    # remove one DMA but change the random stream.
    eps = jax.random.normal(keps, (batch, 10), jnp.float32)

    x_hat, kld = jax.jit(vae_forward)(x, params, eps)
    jax.block_until_ready((x_hat, kld))

    assert x_hat.shape == (batch, 1, 28, 28)
    assert x_hat.dtype == jnp.bfloat16
    assert kld.shape == ()
    assert bool(jnp.isfinite(kld))
    assert bool(jnp.all(jnp.isfinite(x_hat.astype(jnp.float32))))
    print("KERNEL_OK")
</pallas_src>

<mosaic_0001>
module attributes {stable_mosaic.version = 11 : i64} {
  func.func @vae_kernel(%arg0: i32, %arg1: memref<16x784xbf16, #tpu.memory_space<vmem>>, %arg2: memref<16x10xf32, #tpu.memory_space<vmem>>, %arg3: memref<784x256xbf16, #tpu.memory_space<vmem>>, %arg4: memref<1x256xf32, #tpu.memory_space<vmem>>, %arg5: memref<256x64xbf16, #tpu.memory_space<vmem>>, %arg6: memref<1x64xf32, #tpu.memory_space<vmem>>, %arg7: memref<64x20xbf16, #tpu.memory_space<vmem>>, %arg8: memref<1x20xf32, #tpu.memory_space<vmem>>, %arg9: memref<10x64xbf16, #tpu.memory_space<vmem>>, %arg10: memref<1x64xf32, #tpu.memory_space<vmem>>, %arg11: memref<64x256xbf16, #tpu.memory_space<vmem>>, %arg12: memref<1x256xf32, #tpu.memory_space<vmem>>, %arg13: memref<256x784xbf16, #tpu.memory_space<vmem>>, %arg14: memref<1x784xf32, #tpu.memory_space<vmem>>, %arg15: memref<16x784xbf16, #tpu.memory_space<vmem>>, %arg16: memref<16x1xf32, #tpu.memory_space<vmem>>) attributes {dimension_semantics = [#tpu.dimension_semantics<parallel>], iteration_bounds = array<i64: 1>, scalar_prefetch = 0 : i64, scratch_operands = 0 : i64, tpu.core_type = #tpu.core_type<tc>, window_params = [{transform_indices = @transform_0, window_bounds = array<i64: 16, 784>}, {transform_indices = @transform_1, window_bounds = array<i64: 16, 10>}, {pipeline_mode = #tpu.pipeline_mode<synchronous>, transform_indices = @transform_2, window_bounds = array<i64: 784, 256>}, {pipeline_mode = #tpu.pipeline_mode<synchronous>, transform_indices = @transform_3, window_bounds = array<i64: 1, 256>}, {pipeline_mode = #tpu.pipeline_mode<synchronous>, transform_indices = @transform_4, window_bounds = array<i64: 256, 64>}, {pipeline_mode = #tpu.pipeline_mode<synchronous>, transform_indices = @transform_5, window_bounds = array<i64: 1, 64>}, {pipeline_mode = #tpu.pipeline_mode<synchronous>, transform_indices = @transform_6, window_bounds = array<i64: 64, 20>}, {pipeline_mode = #tpu.pipeline_mode<synchronous>, transform_indices = @transform_7, window_bounds = array<i64: 1, 20>}, {pipeline_mode = #tpu.pipeline_mode<synchronous>, transform_indices = @transform_8, window_bounds = array<i64: 10, 64>}, {pipeline_mode = #tpu.pipeline_mode<synchronous>, transform_indices = @transform_9, window_bounds = array<i64: 1, 64>}, {pipeline_mode = #tpu.pipeline_mode<synchronous>, transform_indices = @transform_10, window_bounds = array<i64: 64, 256>}, {pipeline_mode = #tpu.pipeline_mode<synchronous>, transform_indices = @transform_11, window_bounds = array<i64: 1, 256>}, {pipeline_mode = #tpu.pipeline_mode<synchronous>, transform_indices = @transform_12, window_bounds = array<i64: 256, 784>}, {pipeline_mode = #tpu.pipeline_mode<synchronous>, transform_indices = @transform_13, window_bounds = array<i64: 1, 784>}, {transform_indices = @transform_14, window_bounds = array<i64: 16, 784>}, {transform_indices = @transform_15, window_bounds = array<i64: 16, 1>}]} {
    %c0 = arith.constant 0 : index
    %c0_0 = arith.constant 0 : index
    %0 = vector.load %arg1[%c0, %c0_0] : memref<16x784xbf16, #tpu.memory_space<vmem>>, vector<16x784xbf16>
    %c0_1 = arith.constant 0 : index
    %c0_2 = arith.constant 0 : index
    %1 = vector.load %arg3[%c0_1, %c0_2] : memref<784x256xbf16, #tpu.memory_space<vmem>>, vector<784x256xbf16>
    %cst = arith.constant dense<0.000000e+00> : vector<16x256xf32>
    %2 = tpu.matmul %0, %1, %cst {dimension_numbers = #tpu.dot_dimension_numbers<[1], [0], [0], [1], [0, 0, 1, 1], [], []>} : vector<16x784xbf16>, vector<784x256xbf16>, vector<16x256xf32> -> vector<16x256xf32>
    %c0_3 = arith.constant 0 : index
    %c0_4 = arith.constant 0 : index
    %3 = vector.load %arg4[%c0_3, %c0_4] : memref<1x256xf32, #tpu.memory_space<vmem>>, vector<1x256xf32>
    %4 = vector.broadcast %3 : vector<1x256xf32> to vector<16x256xf32>
    %5 = arith.addf %2, %4 : vector<16x256xf32>
    %cst_5 = arith.constant 0.000000e+00 : f32
    %6 = vector.broadcast %cst_5 : f32 to vector<16x256xf32>
    %7 = arith.maximumf %5, %6 : vector<16x256xf32>
    %8 = arith.truncf %7 : vector<16x256xf32> to vector<16x256xbf16>
    %c0_6 = arith.constant 0 : index
    %c0_7 = arith.constant 0 : index
    %9 = vector.load %arg5[%c0_6, %c0_7] : memref<256x64xbf16, #tpu.memory_space<vmem>>, vector<256x64xbf16>
    %cst_8 = arith.constant dense<0.000000e+00> : vector<16x64xf32>
    %10 = tpu.matmul %8, %9, %cst_8 {dimension_numbers = #tpu.dot_dimension_numbers<[1], [0], [0], [1], [0, 0, 1, 1], [], []>} : vector<16x256xbf16>, vector<256x64xbf16>, vector<16x64xf32> -> vector<16x64xf32>
    %c0_9 = arith.constant 0 : index
    %c0_10 = arith.constant 0 : index
    %11 = vector.load %arg6[%c0_9, %c0_10] : memref<1x64xf32, #tpu.memory_space<vmem>>, vector<1x64xf32>
    %12 = vector.broadcast %11 : vector<1x64xf32> to vector<16x64xf32>
    %13 = arith.addf %10, %12 : vector<16x64xf32>
    %cst_11 = arith.constant 0.000000e+00 : f32
    %14 = vector.broadcast %cst_11 : f32 to vector<16x64xf32>
    %15 = arith.maximumf %13, %14 : vector<16x64xf32>
    %16 = arith.truncf %15 : vector<16x64xf32> to vector<16x64xbf16>
    %c0_12 = arith.constant 0 : index
    %c0_13 = arith.constant 0 : index
    %17 = vector.load %arg7[%c0_12, %c0_13] : memref<64x20xbf16, #tpu.memory_space<vmem>>, vector<64x20xbf16>
    %cst_14 = arith.constant dense<0.000000e+00> : vector<16x20xf32>
    %18 = tpu.matmul %16, %17, %cst_14 {dimension_numbers = #tpu.dot_dimension_numbers<[1], [0], [0], [1], [0, 0, 1, 1], [], []>} : vector<16x64xbf16>, vector<64x20xbf16>, vector<16x20xf32> -> vector<16x20xf32>
    %c0_15 = arith.constant 0 : index
    %c0_16 = arith.constant 0 : index
    %19 = vector.load %arg8[%c0_15, %c0_16] : memref<1x20xf32, #tpu.memory_space<vmem>>, vector<1x20xf32>
    %20 = vector.broadcast %19 : vector<1x20xf32> to vector<16x20xf32>
    %21 = arith.addf %18, %20 : vector<16x20xf32>
    %cst_17 = arith.constant 0.000000e+00 : f32
    %22 = vector.broadcast %cst_17 : f32 to vector<16x20xf32>
    %23 = arith.maximumf %21, %22 : vector<16x20xf32>
    %24 = vector.extract_strided_slice %23 {offsets = [0, 0], sizes = [16, 10], strides = [1, 1]} : vector<16x20xf32> to vector<16x10xf32>
    %25 = vector.extract_strided_slice %23 {offsets = [0, 10], sizes = [16, 10], strides = [1, 1]} : vector<16x20xf32> to vector<16x10xf32>
    %c0_18 = arith.constant 0 : index
    %c0_19 = arith.constant 0 : index
    %26 = vector.load %arg2[%c0_18, %c0_19] : memref<16x10xf32, #tpu.memory_space<vmem>>, vector<16x10xf32>
    %27 = arith.mulf %25, %26 : vector<16x10xf32>
    %28 = arith.addf %24, %27 : vector<16x10xf32>
    %29 = arith.truncf %28 : vector<16x10xf32> to vector<16x10xbf16>
    %c0_20 = arith.constant 0 : index
    %c0_21 = arith.constant 0 : index
    %30 = vector.load %arg9[%c0_20, %c0_21] : memref<10x64xbf16, #tpu.memory_space<vmem>>, vector<10x64xbf16>
    %cst_22 = arith.constant dense<0.000000e+00> : vector<16x64xf32>
    %31 = tpu.matmul %29, %30, %cst_22 {dimension_numbers = #tpu.dot_dimension_numbers<[1], [0], [0], [1], [0, 0, 1, 1], [], []>} : vector<16x10xbf16>, vector<10x64xbf16>, vector<16x64xf32> -> vector<16x64xf32>
    %c0_23 = arith.constant 0 : index
    %c0_24 = arith.constant 0 : index
    %32 = vector.load %arg10[%c0_23, %c0_24] : memref<1x64xf32, #tpu.memory_space<vmem>>, vector<1x64xf32>
    %33 = vector.broadcast %32 : vector<1x64xf32> to vector<16x64xf32>
    %34 = arith.addf %31, %33 : vector<16x64xf32>
    %cst_25 = arith.constant 0.000000e+00 : f32
    %35 = vector.broadcast %cst_25 : f32 to vector<16x64xf32>
    %36 = arith.maximumf %34, %35 : vector<16x64xf32>
    %37 = arith.truncf %36 : vector<16x64xf32> to vector<16x64xbf16>
    %c0_26 = arith.constant 0 : index
    %c0_27 = arith.constant 0 : index
    %38 = vector.load %arg11[%c0_26, %c0_27] : memref<64x256xbf16, #tpu.memory_space<vmem>>, vector<64x256xbf16>
    %cst_28 = arith.constant dense<0.000000e+00> : vector<16x256xf32>
    %39 = tpu.matmul %37, %38, %cst_28 {dimension_numbers = #tpu.dot_dimension_numbers<[1], [0], [0], [1], [0, 0, 1, 1], [], []>} : vector<16x64xbf16>, vector<64x256xbf16>, vector<16x256xf32> -> vector<16x256xf32>
    %c0_29 = arith.constant 0 : index
    %c0_30 = arith.constant 0 : index
    %40 = vector.load %arg12[%c0_29, %c0_30] : memref<1x256xf32, #tpu.memory_space<vmem>>, vector<1x256xf32>
    %41 = vector.broadcast %40 : vector<1x256xf32> to vector<16x256xf32>
    %42 = arith.addf %39, %41 : vector<16x256xf32>
    %cst_31 = arith.constant 0.000000e+00 : f32
    %43 = vector.broadcast %cst_31 : f32 to vector<16x256xf32>
    %44 = arith.maximumf %42, %43 : vector<16x256xf32>
    %45 = arith.truncf %44 : vector<16x256xf32> to vector<16x256xbf16>
    %c0_32 = arith.constant 0 : index
    %c0_33 = arith.constant 0 : index
    %46 = vector.load %arg13[%c0_32, %c0_33] : memref<256x784xbf16, #tpu.memory_space<vmem>>, vector<256x784xbf16>
    %cst_34 = arith.constant dense<0.000000e+00> : vector<16x784xf32>
    %47 = tpu.matmul %45, %46, %cst_34 {dimension_numbers = #tpu.dot_dimension_numbers<[1], [0], [0], [1], [0, 0, 1, 1], [], []>} : vector<16x256xbf16>, vector<256x784xbf16>, vector<16x784xf32> -> vector<16x784xf32>
    %c0_35 = arith.constant 0 : index
    %c0_36 = arith.constant 0 : index
    %48 = vector.load %arg14[%c0_35, %c0_36] : memref<1x784xf32, #tpu.memory_space<vmem>>, vector<1x784xf32>
    %49 = vector.broadcast %48 : vector<1x784xf32> to vector<16x784xf32>
    %50 = arith.addf %47, %49 : vector<16x784xf32>
    %cst_37 = arith.constant 0.000000e+00 : f32
    %51 = vector.broadcast %cst_37 : f32 to vector<16x784xf32>
    %52 = arith.subf %51, %50 : vector<16x784xf32>
    %53 = math.exp %52 : vector<16x784xf32>
    %cst_38 = arith.constant 1.000000e+00 : f32
    %54 = vector.broadcast %cst_38 : f32 to vector<16x784xf32>
    %55 = arith.addf %54, %53 : vector<16x784xf32>
    %56 = tpu.reciprocal %55 {approx = true} : vector<16x784xf32> -> vector<16x784xf32>
    %57 = arith.truncf %56 : vector<16x784xf32> to vector<16x784xbf16>
    %c0_39 = arith.constant 0 : index
    %c0_40 = arith.constant 0 : index
    %58 = vector.load %arg15[%c0_39, %c0_40] : memref<16x784xbf16, #tpu.memory_space<vmem>>, vector<16x784xbf16>
    tpu.vector_store %arg15[%c0_39, %c0_40], %57 {strides = array<i32>} : memref<16x784xbf16, #tpu.memory_space<vmem>>, vector<16x784xbf16>,
    %59 = arith.mulf %25, %25 : vector<16x10xf32>
    %60 = arith.mulf %24, %24 : vector<16x10xf32>
    %61 = arith.addf %60, %59 : vector<16x10xf32>
    %cst_41 = arith.constant 9.99999993E-9 : f32
    %62 = vector.broadcast %cst_41 : f32 to vector<16x10xf32>
    %63 = arith.addf %62, %59 : vector<16x10xf32>
    %64 = math.log %63 : vector<16x10xf32>
    %65 = arith.subf %61, %64 : vector<16x10xf32>
    %cst_42 = arith.constant 1.000000e+00 : f32
    %66 = vector.broadcast %cst_42 : f32 to vector<16x10xf32>
    %67 = arith.subf %65, %66 : vector<16x10xf32>
    %cst_43 = arith.constant dense<0.000000e+00> : vector<16xf32>
    %68 = vector.multi_reduction <add>, %67, %cst_43 [1] : vector<16x10xf32> to vector<16xf32>
    %69 = vector.shape_cast %68 : vector<16xf32> to vector<16x1xf32>
    %c0_44 = arith.constant 0 : index
    %c0_45 = arith.constant 0 : index
    %70 = vector.load %arg16[%c0_44, %c0_45] : memref<16x1xf32, #tpu.memory_space<vmem>>, vector<16x1xf32>
    tpu.vector_store %arg16[%c0_44, %c0_45], %69 {strides = array<i32>} : memref<16x1xf32, #tpu.memory_space<vmem>>, vector<16x1xf32>,
    return
  }
  func.func @transform_0(%arg0: i32) -> (i32, i32) {
    %c0_i32 = arith.constant 0 : i32
    %c0_i32_0 = arith.constant 0 : i32
    return %arg0, %c0_i32 : i32, i32
  }
  func.func @transform_1(%arg0: i32) -> (i32, i32) {
    %c0_i32 = arith.constant 0 : i32
    %c0_i32_0 = arith.constant 0 : i32
    return %arg0, %c0_i32 : i32, i32
  }
  func.func @transform_2(%arg0: i32) -> (i32, i32) {
    %c0_i32 = arith.constant 0 : i32
    %c0_i32_0 = arith.constant 0 : i32
    %c0_i32_1 = arith.constant 0 : i32
    return %c0_i32, %c0_i32_0 : i32, i32
  }
  func.func @transform_3(%arg0: i32) -> (i32, i32) {
    %c0_i32 = arith.constant 0 : i32
    %c0_i32_0 = arith.constant 0 : i32
    %c0_i32_1 = arith.constant 0 : i32
    return %c0_i32, %c0_i32_0 : i32, i32
  }
  func.func @transform_4(%arg0: i32) -> (i32, i32) {
    %c0_i32 = arith.constant 0 : i32
    %c0_i32_0 = arith.constant 0 : i32
    %c0_i32_1 = arith.constant 0 : i32
    return %c0_i32, %c0_i32_0 : i32, i32
  }
  func.func @transform_5(%arg0: i32) -> (i32, i32) {
    %c0_i32 = arith.constant 0 : i32
    %c0_i32_0 = arith.constant 0 : i32
    %c0_i32_1 = arith.constant 0 : i32
    return %c0_i32, %c0_i32_0 : i32, i32
  }
  func.func @transform_6(%arg0: i32) -> (i32, i32) {
    %c0_i32 = arith.constant 0 : i32
    %c0_i32_0 = arith.constant 0 : i32
    %c0_i32_1 = arith.constant 0 : i32
    return %c0_i32, %c0_i32_0 : i32, i32
  }
  func.func @transform_7(%arg0: i32) -> (i32, i32) {
    %c0_i32 = arith.constant 0 : i32
    %c0_i32_0 = arith.constant 0 : i32
    %c0_i32_1 = arith.constant 0 : i32
    return %c0_i32, %c0_i32_0 : i32, i32
  }
  func.func @transform_8(%arg0: i32) -> (i32, i32) {
    %c0_i32 = arith.constant 0 : i32
    %c0_i32_0 = arith.constant 0 : i32
    %c0_i32_1 = arith.constant 0 : i32
    return %c0_i32, %c0_i32_0 : i32, i32
  }
  func.func @transform_9(%arg0: i32) -> (i32, i32) {
    %c0_i32 = arith.constant 0 : i32
    %c0_i32_0 = arith.constant 0 : i32
    %c0_i32_1 = arith.constant 0 : i32
    return %c0_i32, %c0_i32_0 : i32, i32
  }
  func.func @transform_10(%arg0: i32) -> (i32, i32) {
    %c0_i32 = arith.constant 0 : i32
    %c0_i32_0 = arith.constant 0 : i32
    %c0_i32_1 = arith.constant 0 : i32
    return %c0_i32, %c0_i32_0 : i32, i32
  }
  func.func @transform_11(%arg0: i32) -> (i32, i32) {
    %c0_i32 = arith.constant 0 : i32
    %c0_i32_0 = arith.constant 0 : i32
    %c0_i32_1 = arith.constant 0 : i32
    return %c0_i32, %c0_i32_0 : i32, i32
  }
  func.func @transform_12(%arg0: i32) -> (i32, i32) {
    %c0_i32 = arith.constant 0 : i32
    %c0_i32_0 = arith.constant 0 : i32
    %c0_i32_1 = arith.constant 0 : i32
    return %c0_i32, %c0_i32_0 : i32, i32
  }
  func.func @transform_13(%arg0: i32) -> (i32, i32) {
    %c0_i32 = arith.constant 0 : i32
    %c0_i32_0 = arith.constant 0 : i32
    %c0_i32_1 = arith.constant 0 : i32
    return %c0_i32, %c0_i32_0 : i32, i32
  }
  func.func @transform_14(%arg0: i32) -> (i32, i32) {
    %c0_i32 = arith.constant 0 : i32
    %c0_i32_0 = arith.constant 0 : i32
    return %arg0, %c0_i32 : i32, i32
  }
  func.func @transform_15(%arg0: i32) -> (i32, i32) {
    %c0_i32 = arith.constant 0 : i32
    %c0_i32_0 = arith.constant 0 : i32
    return %arg0, %c0_i32 : i32, i32
  }
}

</mosaic_0001>

<llo_original>
// kernel: vae_forward.1
$region0: #{vae_forward.1}
  #allocation0 [shape = 'u32[]', space=smem, size = 0x4, offset = 0x4, fixed_abs, tag = 'smem constant byte address 0x4 - core index']
  #allocation1 [shape = 'u32[144,128]{1,0:T(1,128)}', space=vmem, size = 0x12000, scoped, tag = 'internal scratch']
  %s0 = inlined_call_operand.vmem [shape: bf16[16,784], index: 0, kind: input, shape index: {}]
  %s1 = inlined_call_operand.vmem [shape: f32[16,10], index: 1, kind: input, shape index: {}]
  %s2 = inlined_call_operand.vmem [shape: bf16[784,256], index: 2, kind: input, shape index: {}]
  %s3 = inlined_call_operand.vmem [shape: f32[1,256], index: 3, kind: input, shape index: {}]
  %s4 = inlined_call_operand.vmem [shape: bf16[256,64], index: 4, kind: input, shape index: {}]
  %s5 = inlined_call_operand.vmem [shape: f32[1,64], index: 5, kind: input, shape index: {}]
  %s6 = inlined_call_operand.vmem [shape: bf16[64,20], index: 6, kind: input, shape index: {}]
  %s7 = inlined_call_operand.vmem [shape: f32[1,20], index: 7, kind: input, shape index: {}]
  %s8 = inlined_call_operand.vmem [shape: bf16[10,64], index: 8, kind: input, shape index: {}]
  %s9 = inlined_call_operand.vmem [shape: f32[1,64], index: 9, kind: input, shape index: {}]
  %s10 = inlined_call_operand.vmem [shape: bf16[64,256], index: 10, kind: input, shape index: {}]
  %s11 = inlined_call_operand.vmem [shape: f32[1,256], index: 11, kind: input, shape index: {}]
  %s12 = inlined_call_operand.vmem [shape: bf16[256,784], index: 12, kind: input, shape index: {}]
  %s13 = inlined_call_operand.vmem [shape: f32[1,784], index: 13, kind: input, shape index: {}]
  %s14 = inlined_call_operand.vmem [shape: bf16[16,784], index: 14, kind: output, shape index: {0}]
  %s15 = inlined_call_operand.vmem [shape: f32[16,1], index: 15, kind: output, shape index: {1}]
  %16 = xla_tuple %s14, %s15
  %s17 = sld [smem:[#allocation0]]
  $region74: #{vae_forward.1} parent=0
    _
  %s19 = ssub.s32 1, %s17
  %s20 = scalar_select 0, %s19, %s17
  // Predicated region
  $region2: #{vae_forward.1} parent=0 // pred_check
    _
  $region3: #{vae_forward.1} parent=0 // pred_check_branch
    %22 = sbr.rel (0) target = $region5
  $region4: #{vae_forward.1} parent=0 // pred_region
    _
  $region5: #{vae_forward.1} parent=0 // pred_fallthru
    _
  // Predicated region
  $region6: #{vae_forward.1} parent=0 // pred_check
    _
  $region7: #{vae_forward.1} parent=0 // pred_check_branch
    %24 = sbr.rel (0) target = $region9
  $region8: #{vae_forward.1} parent=0 // pred_region
    _
  $region9: #{vae_forward.1} parent=0 // pred_fallthru
    _
  // Predicated region
  $region10: #{vae_forward.1} parent=0 // pred_check
    _
  $region11: #{vae_forward.1} parent=0 // pred_check_branch
    %26 = sbr.rel (0) target = $region13
  $region12: #{vae_forward.1} parent=0 // pred_region
    _
  $region13: #{vae_forward.1} parent=0 // pred_fallthru
    _
  // Predicated region
  $region14: #{vae_forward.1} parent=0 // pred_check
    _
  $region15: #{vae_forward.1} parent=0 // pred_check_branch
    %28 = sbr.rel (0) target = $region17
  $region16: #{vae_forward.1} parent=0 // pred_region
    _
  $region17: #{vae_forward.1} parent=0 // pred_fallthru
    _
  // Predicated region
  $region18: #{vae_forward.1} parent=0 // pred_check
    _
  $region19: #{vae_forward.1} parent=0 // pred_check_branch
    %30 = sbr.rel (0) target = $region21
  $region20: #{vae_forward.1} parent=0 // pred_region
    _
  $region21: #{vae_forward.1} parent=0 // pred_fallthru
    _
  // Predicated region
  $region22: #{vae_forward.1} parent=0 // pred_check
    _
  $region23: #{vae_forward.1} parent=0 // pred_check_branch
    %32 = sbr.rel (0) target = $region25
  $region24: #{vae_forward.1} parent=0 // pred_region
    _
  $region25: #{vae_forward.1} parent=0 // pred_fallthru
    _
  // Predicated region
  $region26: #{vae_forward.1} parent=0 // pred_check
    _
  $region27: #{vae_forward.1} parent=0 // pred_check_branch
    %34 = sbr.rel (0) target = $region29
  $region28: #{vae_forward.1} parent=0 // pred_region
    _
  $region29: #{vae_forward.1} parent=0 // pred_fallthru
    _
  // Predicated region
  $region30: #{vae_forward.1} parent=0 // pred_check
    _
  $region31: #{vae_forward.1} parent=0 // pred_check_branch
    %36 = sbr.rel (0) target = $region33
  $region32: #{vae_forward.1} parent=0 // pred_region
    _
  $region33: #{vae_forward.1} parent=0 // pred_fallthru
    _
  // Predicated region
  $region34: #{vae_forward.1} parent=0 // pred_check
    _
  $region35: #{vae_forward.1} parent=0 // pred_check_branch
    %38 = sbr.rel (0) target = $region37
  $region36: #{vae_forward.1} parent=0 // pred_region
    _
  $region37: #{vae_forward.1} parent=0 // pred_fallthru
    _
  // Predicated region
  $region38: #{vae_forward.1} parent=0 // pred_check
    _
  $region39: #{vae_forward.1} parent=0 // pred_check_branch
    %40 = sbr.rel (0) target = $region41
  $region40: #{vae_forward.1} parent=0 // pred_region
    _
  $region41: #{vae_forward.1} parent=0 // pred_fallthru
    _
  // Predicated region
  $region42: #{vae_forward.1} parent=0 // pred_check
    _
  $region43: #{vae_forward.1} parent=0 // pred_check_branch
    %42 = sbr.rel (0) target = $region45
  $region44: #{vae_forward.1} parent=0 // pred_region
    _
  $region45: #{vae_forward.1} parent=0 // pred_fallthru
    _
  // Predicated region
  $region46: #{vae_forward.1} parent=0 // pred_check
    _
  $region47: #{vae_forward.1} parent=0 // pred_check_branch
    %44 = sbr.rel (0) target = $region49
  $region48: #{vae_forward.1} parent=0 // pred_region
    _
  $region49: #{vae_forward.1} parent=0 // pred_fallthru
    _
  // Predicated region
  $region50: #{vae_forward.1} parent=0 // pred_check
    _
  $region51: #{vae_forward.1} parent=0 // pred_check_branch
    %46 = sbr.rel (0) target = $region53
  $region52: #{vae_forward.1} parent=0 // pred_region
    _
  $region53: #{vae_forward.1} parent=0 // pred_fallthru
    _
  // Predicated region
  $region54: #{vae_forward.1} parent=0 // pred_check
    _
  $region55: #{vae_forward.1} parent=0 // pred_check_branch
    %48 = sbr.rel (0) target = $region57
  $region56: #{vae_forward.1} parent=0 // pred_region
    _
  $region57: #{vae_forward.1} parent=0 // pred_fallthru
    _
  %v50 = vld [vmem:[%s0] sm:$0xff]
  %v51 = vld [vmem:[%s0 + $0x8] sm:$0xff]
  %v52 = vld [vmem:[%s0 + $0x10] sm:$0xff]
  %v53 = vld [vmem:[%s0 + $0x18] sm:$0xf]
  %v54 = vld [vmem:[%s0 + $0x1c] sm:$0xff]
  %v55 = vld [vmem:[%s0 + $0x24] sm:$0xff]
  %v56 = vld [vmem:[%s0 + $0x2c] sm:$0xff]
  %v57 = vld [vmem:[%s0 + $0x34] sm:$0xf]
  %v58 = vld [vmem:[%s2] sm:$0xff]
  %v59 = vld [vmem:[%s2 + $0x8] sm:$0xff]
  %v60 = vld [vmem:[%s2 + $0x10] sm:$0xff]
  %v61 = vld [vmem:[%s2 + $0x18] sm:$0xff]
  %v62 = vld [vmem:[%s2 + $0x20] sm:$0xff]
  %v63 = vld [vmem:[%s2 + $0x28] sm:$0xff]
  %v64 = vld [vmem:[%s2 + $0x30] sm:$0xff]
  %v65 = vld [vmem:[%s2 + $0x38] sm:$0xff]
  %v66 = vld [vmem:[%s2 + $0x40] sm:$0xff]
  %v67 = vld [vmem:[%s2 + $0x48] sm:$0xff]
  %v68 = vld [vmem:[%s2 + $0x50] sm:$0xff]
  %v69 = vld [vmem:[%s2 + $0x58] sm:$0xff]
  %v70 = vld [vmem:[%s2 + $0x60] sm:$0xff]
  %v71 = vld [vmem:[%s2 + $0x68] sm:$0xff]
  %v72 = vld [vmem:[%s2 + $0x70] sm:$0xff]
  %v73 = vld [vmem:[%s2 + $0x78] sm:$0xff]
  %v74 = vld [vmem:[%s2 + $0x80] sm:$0xff]
  %v75 = vld [vmem:[%s2 + $0x88] sm:$0xff]
  %v76 = vld [vmem:[%s2 + $0x90] sm:$0xff]
  %v77 = vld [vmem:[%s2 + $0x98] sm:$0xff]
  %v78 = vld [vmem:[%s2 + $0xa0] sm:$0xff]
  %v79 = vld [vmem:[%s2 + $0xa8] sm:$0xff]
  %v80 = vld [vmem:[%s2 + $0xb0] sm:$0xff]
  %v81 = vld [vmem:[%s2 + $0xb8] sm:$0xff]
  %v82 = vld [vmem:[%s2 + $0xc0] sm:$0xff]
  %v83 = vld [vmem:[%s2 + $0xc8] sm:$0xff]
  %v84 = vld [vmem:[%s2 + $0xd0] sm:$0xff]
  %v85 = vld [vmem:[%s2 + $0xd8] sm:$0xff]
  %v86 = vld [vmem:[%s2 + $0xe0] sm:$0xff]
  %v87 = vld [vmem:[%s2 + $0xe8] sm:$0xff]
  %v88 = vld [vmem:[%s2 + $0xf0] sm:$0xff]
  %v89 = vld [vmem:[%s2 + $0xf8] sm:$0xff]
  %v90 = vld [vmem:[%s2 + $0x100] sm:$0xff]
  %v91 = vld [vmem:[%s2 + $0x108] sm:$0xff]
  %v92 = vld [vmem:[%s2 + $0x110] sm:$0xff]
  %v93 = vld [vmem:[%s2 + $0x118] sm:$0xff]
  %v94 = vld [vmem:[%s2 + $0x120] sm:$0xff]
  %v95 = vld [vmem:[%s2 + $0x128] sm:$0xff]
  %v96 = vld [vmem:[%s2 + $0x130] sm:$0xff]
  %v97 = vld [vmem:[%s2 + $0x138] sm:$0xff]
  %v98 = vld [vmem:[%s2 + $0x140] sm:$0xff]
  %v99 = vld [vmem:[%s2 + $0x148] sm:$0xff]
  %v100 = vld [vmem:[%s2 + $0x150] sm:$0xff]
  %v101 = vld [vmem:[%s2 + $0x158] sm:$0xff]
  %v102 = vld [vmem:[%s2 + $0x160] sm:$0xff]
  %v103 = vld [vmem:[%s2 + $0x168] sm:$0xff]
  %v104 = vld [vmem:[%s2 + $0x170] sm:$0xff]
  %v105 = vld [vmem:[%s2 + $0x178] sm:$0xff]
  %v106 = vld [vmem:[%s2 + $0x180] sm:$0xff]
  %v107 = vld [vmem:[%s2 + $0x188] sm:$0xff]
  %v108 = vld [vmem:[%s2 + $0x190] sm:$0xff]
  %v109 = vld [vmem:[%s2 + $0x198] sm:$0xff]
  %v110 = vld [vmem:[%s2 + $0x1a0] sm:$0xff]
  %v111 = vld [vmem:[%s2 + $0x1a8] sm:$0xff]
  %v112 = vld [vmem:[%s2 + $0x1b0] sm:$0xff]
  %v113 = vld [vmem:[%s2 + $0x1b8] sm:$0xff]
  %v114 = vld [vmem:[%s2 + $0x1c0] sm:$0xff]
  %v115 = vld [vmem:[%s2 + $0x1c8] sm:$0xff]
  %v116 = vld [vmem:[%s2 + $0x1d0] sm:$0xff]
  %v117 = vld [vmem:[%s2 + $0x1d8] sm:$0xff]
  %v118 = vld [vmem:[%s2 + $0x1e0] sm:$0xff]
  %v119 = vld [vmem:[%s2 + $0x1e8] sm:$0xff]
  %v120 = vld [vmem:[%s2 + $0x1f0] sm:$0xff]
  %v121 = vld [vmem:[%s2 + $0x1f8] sm:$0xff]
  %v122 = vld [vmem:[%s2 + $0x200] sm:$0xff]
  %v123 = vld [vmem:[%s2 + $0x208] sm:$0xff]
  %v124 = vld [vmem:[%s2 + $0x210] sm:$0xff]
  %v125 = vld [vmem:[%s2 + $0x218] sm:$0xff]
  %v126 = vld [vmem:[%s2 + $0x220] sm:$0xff]
  %v127 = vld [vmem:[%s2 + $0x228] sm:$0xff]
  %v128 = vld [vmem:[%s2 + $0x230] sm:$0xff]
  %v129 = vld [vmem:[%s2 + $0x238] sm:$0xff]
  %v130 = vld [vmem:[%s2 + $0x240] sm:$0xff]
  %v131 = vld [vmem:[%s2 + $0x248] sm:$0xff]
  %v132 = vld [vmem:[%s2 + $0x250] sm:$0xff]
  %v133 = vld [vmem:[%s2 + $0x258] sm:$0xff]
  %v134 = vld [vmem:[%s2 + $0x260] sm:$0xff]
  %v135 = vld [vmem:[%s2 + $0x268] sm:$0xff]
  %v136 = vld [vmem:[%s2 + $0x270] sm:$0xff]
  %v137 = vld [vmem:[%s2 + $0x278] sm:$0xff]
  %v138 = vld [vmem:[%s2 + $0x280] sm:$0xff]
  %v139 = vld [vmem:[%s2 + $0x288] sm:$0xff]
  %v140 = vld [vmem:[%s2 + $0x290] sm:$0xff]
  %v141 = vld [vmem:[%s2 + $0x298] sm:$0xff]
  %v142 = vld [vmem:[%s2 + $0x2a0] sm:$0xff]
  %v143 = vld [vmem:[%s2 + $0x2a8] sm:$0xff]
  %v144 = vld [vmem:[%s2 + $0x2b0] sm:$0xff]
  %v145 = vld [vmem:[%s2 + $0x2b8] sm:$0xff]
  %v146 = vld [vmem:[%s2 + $0x2c0] sm:$0xff]
  %v147 = vld [vmem:[%s2 + $0x2c8] sm:$0xff]
  %v148 = vld [vmem:[%s2 + $0x2d0] sm:$0xff]
  %v149 = vld [vmem:[%s2 + $0x2d8] sm:$0xff]
  %v150 = vld [vmem:[%s2 + $0x2e0] sm:$0xff]
  %v151 = vld [vmem:[%s2 + $0x2e8] sm:$0xff]
  %v152 = vld [vmem:[%s2 + $0x2f0] sm:$0xff]
  %v153 = vld [vmem:[%s2 + $0x2f8] sm:$0xff]
  %v154 = vld [vmem:[%s2 + $0x300] sm:$0xff]
  %v155 = vld [vmem:[%s2 + $0x308] sm:$0xff]
  %v156 = vld [vmem:[%s3] sm:$0x3]
  %v158 = vlaneseq
  %v159 = vshrl.u32 %v158, 7
  %v160 = vsub.s32 0, %v159
  %v161 = vrot.slane %v156, %v160
  %v162 = vlaneseq
  %v163 = vshrl.u32 %v162, 7
  %v164 = vsub.s32 1, %v163
  %v165 = vrot.slane %v156, %v164
  %v176 = vunpack.c.l.b16 %v50
  %v177 = vunpack.c.h.b16 %v50
  %v178 = vunpack.c.l.b16 %v51
  %v179 = vunpack.c.h.b16 %v51
  %v180 = vunpack.c.l.b16 %v52
  %v181 = vunpack.c.h.b16 %v52
  %v182 = vunpack.c.l.b16 %v53
  %v183 = vunpack.c.l.b16 %v54
  %v184 = vunpack.c.h.b16 %v54
  %v185 = vunpack.c.l.b16 %v55
  %v186 = vunpack.c.h.b16 %v55
  %v187 = vunpack.c.l.b16 %v56
  %v188 = vunpack.c.h.b16 %v56
  %v189 = vunpack.c.l.b16 %v57
  %v190 = vpack.c.b16 %v183, %v176
  %v191 = vpack.c.b16 %v184, %v177
  %v192 = vpack.c.b16 %v185, %v178
  %v193 = vpack.c.b16 %v186, %v179
  %v194 = vpack.c.b16 %v187, %v180
  %v195 = vpack.c.b16 %v188, %v181
  %v196 = vpack.c.b16 %v189, %v182
  %v301 = vunpack.c.l.b16 %v58
  %v302 = vunpack.c.h.b16 %v58
  %v303 = vunpack.c.l.b16 %v59
  %v304 = vunpack.c.h.b16 %v59
  %v305 = vunpack.c.l.b16 %v60
  %v306 = vunpack.c.h.b16 %v60
  %v307 = vunpack.c.l.b16 %v61
  %v308 = vunpack.c.h.b16 %v61
  %v309 = vunpack.c.l.b16 %v62
  %v310 = vunpack.c.h.b16 %v62
  %v311 = vunpack.c.l.b16 %v63
  %v312 = vunpack.c.h.b16 %v63
  %v313 = vunpack.c.l.b16 %v64
  %v314 = vunpack.c.h.b16 %v64
  %v315 = vunpack.c.l.b16 %v65
  %v316 = vunpack.c.h.b16 %v65
  %v317 = vunpack.c.l.b16 %v66
  %v318 = vunpack.c.h.b16 %v66
  %v319 = vunpack.c.l.b16 %v67
  %v320 = vunpack.c.h.b16 %v67
  %v321 = vunpack.c.l.b16 %v68
  %v322 = vunpack.c.h.b16 %v68
  %v323 = vunpack.c.l.b16 %v69
  %v324 = vunpack.c.h.b16 %v69
  %v325 = vunpack.c.l.b16 %v70
  %v326 = vunpack.c.h.b16 %v70
  %v327 = vunpack.c.l.b16 %v71
  %v328 = vunpack.c.h.b16 %v71
  %v329 = vunpack.c.l.b16 %v72
  %v330 = vunpack.c.h.b16 %v72
  %v331 = vunpack.c.l.b16 %v73
  %v332 = vunpack.c.h.b16 %v73
  %v333 = vunpack.c.l.b16 %v74
  %v334 = vunpack.c.h.b16 %v74
  %v335 = vunpack.c.l.b16 %v75
  %v336 = vunpack.c.h.b16 %v75
  %v337 = vunpack.c.l.b16 %v76
  %v338 = vunpack.c.h.b16 %v76
  %v339 = vunpack.c.l.b16 %v77
  %v340 = vunpack.c.h.b16 %v77
  %v341 = vunpack.c.l.b16 %v78
  %v342 = vunpack.c.h.b16 %v78
  %v343 = vunpack.c.l.b16 %v79
  %v344 = vunpack.c.h.b16 %v79
  %v345 = vunpack.c.l.b16 %v80
  %v346 = vunpack.c.h.b16 %v80
  %v347 = vunpack.c.l.b16 %v81
  %v348 = vunpack.c.h.b16 %v81
  %v349 = vunpack.c.l.b16 %v82
  %v350 = vunpack.c.h.b16 %v82
  %v351 = vunpack.c.l.b16 %v83
  %v352 = vunpack.c.h.b16 %v83
  %v353 = vunpack.c.l.b16 %v84
  %v354 = vunpack.c.h.b16 %v84
  %v355 = vunpack.c.l.b16 %v85
  %v356 = vunpack.c.h.b16 %v85
  %v357 = vunpack.c.l.b16 %v86
  %v358 = vunpack.c.h.b16 %v86
  %v359 = vunpack.c.l.b16 %v87
  %v360 = vunpack.c.h.b16 %v87
  %v361 = vunpack.c.l.b16 %v88
  %v362 = vunpack.c.h.b16 %v88
  %v363 = vunpack.c.l.b16 %v89
  %v364 = vunpack.c.h.b16 %v89
  %v365 = vunpack.c.l.b16 %v90
  %v366 = vunpack.c.h.b16 %v90
  %v367 = vunpack.c.l.b16 %v91
  %v368 = vunpack.c.h.b16 %v91
  %v369 = vunpack.c.l.b16 %v92
  %v370 = vunpack.c.h.b16 %v92
  %v371 = vunpack.c.l.b16 %v93
  %v372 = vunpack.c.h.b16 %v93
  %v373 = vunpack.c.l.b16 %v94
  %v374 = vunpack.c.h.b16 %v94
  %v375 = vunpack.c.l.b16 %v95
  %v376 = vunpack.c.h.b16 %v95
  %v377 = vunpack.c.l.b16 %v96
  %v378 = vunpack.c.h.b16 %v96
  %v379 = vunpack.c.l.b16 %v97
  %v380 = vunpack.c.h.b16 %v97
  %v381 = vunpack.c.l.b16 %v98
  %v382 = vunpack.c.h.b16 %v98
  %v383 = vunpack.c.l.b16 %v99
  %v384 = vunpack.c.h.b16 %v99
  %v385 = vunpack.c.l.b16 %v100
  %v386 = vunpack.c.h.b16 %v100
  %v387 = vunpack.c.l.b16 %v101
  %v388 = vunpack.c.h.b16 %v101
  %v389 = vunpack.c.l.b16 %v102
  %v390 = vunpack.c.h.b16 %v102
  %v391 = vunpack.c.l.b16 %v103
  %v392 = vunpack.c.h.b16 %v103
  %v393 = vunpack.c.l.b16 %v104
  %v394 = vunpack.c.h.b16 %v104
  %v395 = vunpack.c.l.b16 %v105
  %v396 = vunpack.c.h.b16 %v105
  %v397 = vunpack.c.l.b16 %v106
  %v398 = vunpack.c.h.b16 %v106
  %v399 = vunpack.c.l.b16 %v107
  %v400 = vunpack.c.h.b16 %v107
  %v401 = vunpack.c.l.b16 %v108
  %v402 = vunpack.c.h.b16 %v108
  %v403 = vunpack.c.l.b16 %v109
  %v404 = vunpack.c.h.b16 %v109
  %v405 = vunpack.c.l.b16 %v110
  %v406 = vunpack.c.h.b16 %v110
  %v407 = vunpack.c.l.b16 %v111
  %v408 = vunpack.c.h.b16 %v111
  %v409 = vunpack.c.l.b16 %v112
  %v410 = vunpack.c.h.b16 %v112
  %v411 = vunpack.c.l.b16 %v113
  %v412 = vunpack.c.h.b16 %v113
  %v413 = vunpack.c.l.b16 %v114
  %v414 = vunpack.c.h.b16 %v114
  %v415 = vunpack.c.l.b16 %v115
  %v416 = vunpack.c.h.b16 %v115
  %v417 = vunpack.c.l.b16 %v116
  %v418 = vunpack.c.h.b16 %v116
  %v419 = vunpack.c.l.b16 %v117
  %v420 = vunpack.c.h.b16 %v117
  %v421 = vunpack.c.l.b16 %v118
  %v422 = vunpack.c.h.b16 %v118
  %v423 = vunpack.c.l.b16 %v119
  %v424 = vunpack.c.h.b16 %v119
  %v425 = vunpack.c.l.b16 %v120
  %v426 = vunpack.c.h.b16 %v120
  %v427 = vunpack.c.l.b16 %v121
  %v428 = vunpack.c.h.b16 %v121
  %v429 = vunpack.c.l.b16 %v122
  %v430 = vunpack.c.h.b16 %v122
  %v431 = vunpack.c.l.b16 %v123
  %v432 = vunpack.c.h.b16 %v123
  %v433 = vunpack.c.l.b16 %v124
  %v434 = vunpack.c.h.b16 %v124
  %v435 = vunpack.c.l.b16 %v125
  %v436 = vunpack.c.h.b16 %v125
  %v437 = vunpack.c.l.b16 %v126
  %v438 = vunpack.c.h.b16 %v126
  %v439 = vunpack.c.l.b16 %v127
  %v440 = vunpack.c.h.b16 %v127
  %v441 = vunpack.c.l.b16 %v128
  %v442 = vunpack.c.h.b16 %v128
  %v443 = vunpack.c.l.b16 %v129
  %v444 = vunpack.c.h.b16 %v129
  %v445 = vunpack.c.l.b16 %v130
  %v446 = vunpack.c.h.b16 %v130
  %v447 = vunpack.c.l.b16 %v131
  %v448 = vunpack.c.h.b16 %v131
  %v449 = vunpack.c.l.b16 %v132
  %v450 = vunpack.c.h.b16 %v132
  %v451 = vunpack.c.l.b16 %v133
  %v452 = vunpack.c.h.b16 %v133
  %v453 = vunpack.c.l.b16 %v134
  %v454 = vunpack.c.h.b16 %v134
  %v455 = vunpack.c.l.b16 %v135
  %v456 = vunpack.c.h.b16 %v135
  %v457 = vunpack.c.l.b16 %v136
  %v458 = vunpack.c.h.b16 %v136
  %v459 = vunpack.c.l.b16 %v137
  %v460 = vunpack.c.h.b16 %v137
  %v461 = vunpack.c.l.b16 %v138
  %v462 = vunpack.c.h.b16 %v138
  %v463 = vunpack.c.l.b16 %v139
  %v464 = vunpack.c.h.b16 %v139
  %v465 = vunpack.c.l.b16 %v140
  %v466 = vunpack.c.h.b16 %v140
  %v467 = vunpack.c.l.b16 %v141
  %v468 = vunpack.c.h.b16 %v141
  %v469 = vunpack.c.l.b16 %v142
  %v470 = vunpack.c.h.b16 %v142
  %v471 = vunpack.c.l.b16 %v143
  %v472 = vunpack.c.h.b16 %v143
  %v473 = vunpack.c.l.b16 %v144
  %v474 = vunpack.c.h.b16 %v144
  %v475 = vunpack.c.l.b16 %v145
  %v476 = vunpack.c.h.b16 %v145
  %v477 = vunpack.c.l.b16 %v146
  %v478 = vunpack.c.h.b16 %v146
  %v479 = vunpack.c.l.b16 %v147
  %v480 = vunpack.c.h.b16 %v147
  %v481 = vunpack.c.l.b16 %v148
  %v482 = vunpack.c.h.b16 %v148
  %v483 = vunpack.c.l.b16 %v149
  %v484 = vunpack.c.h.b16 %v149
  %v485 = vunpack.c.l.b16 %v150
  %v486 = vunpack.c.h.b16 %v150
  %v487 = vunpack.c.l.b16 %v151
  %v488 = vunpack.c.h.b16 %v151
  %v489 = vunpack.c.l.b16 %v152
  %v490 = vunpack.c.h.b16 %v152
  %v491 = vunpack.c.l.b16 %v153
  %v492 = vunpack.c.h.b16 %v153
  %v493 = vunpack.c.l.b16 %v154
  %v494 = vunpack.c.h.b16 %v154
  %v495 = vunpack.c.l.b16 %v155
  %v496 = vunpack.c.h.b16 %v155
  %v497 = vpack.c.b16 %v303, %v301
  %v498 = vpack.c.b16 %v304, %v302
  %v499 = vpack.c.b16 %v307, %v305
  %v500 = vpack.c.b16 %v308, %v306
  %v501 = vpack.c.b16 %v311, %v309
  %v502 = vpack.c.b16 %v312, %v310
  %v503 = vpack.c.b16 %v315, %v313
  %v504 = vpack.c.b16 %v316, %v314
  %v505 = vpack.c.b16 %v319, %v317
  %v506 = vpack.c.b16 %v320, %v318
  %v507 = vpack.c.b16 %v323, %v321
  %v508 = vpack.c.b16 %v324, %v322
  %v509 = vpack.c.b16 %v327, %v325
  %v510 = vpack.c.b16 %v328, %v326
  %v511 = vpack.c.b16 %v331, %v329
  %v512 = vpack.c.b16 %v332, %v330
  %v513 = vpack.c.b16 %v335, %v333
  %v514 = vpack.c.b16 %v336, %v334
  %v515 = vpack.c.b16 %v339, %v337
  %v516 = vpack.c.b16 %v340, %v338
  %v517 = vpack.c.b16 %v343, %v341
  %v518 = vpack.c.b16 %v344, %v342
  %v519 = vpack.c.b16 %v347, %v345
  %v520 = vpack.c.b16 %v348, %v346
  %v521 = vpack.c.b16 %v351, %v349
  %v522 = vpack.c.b16 %v352, %v350
  %v523 = vpack.c.b16 %v355, %v353
  %v524 = vpack.c.b16 %v356, %v354
  %v525 = vpack.c.b16 %v359, %v357
  %v526 = vpack.c.b16 %v360, %v358
  %v527 = vpack.c.b16 %v363, %v361
  %v528 = vpack.c.b16 %v364, %v362
  %v529 = vpack.c.b16 %v367, %v365
  %v530 = vpack.c.b16 %v368, %v366
  %v531 = vpack.c.b16 %v371, %v369
  %v532 = vpack.c.b16 %v372, %v370
  %v533 = vpack.c.b16 %v375, %v373
  %v534 = vpack.c.b16 %v376, %v374
  %v535 = vpack.c.b16 %v379, %v377
  %v536 = vpack.c.b16 %v380, %v378
  %v537 = vpack.c.b16 %v383, %v381
  %v538 = vpack.c.b16 %v384, %v382
  %v539 = vpack.c.b16 %v387, %v385
  %v540 = vpack.c.b16 %v388, %v386
  %v541 = vpack.c.b16 %v391, %v389
  %v542 = vpack.c.b16 %v392, %v390
  %v543 = vpack.c.b16 %v395, %v393
  %v544 = vpack.c.b16 %v396, %v394
  %v545 = vpack.c.b16 %v399, %v397
  %v546 = vpack.c.b16 %v400, %v398
  %v547 = vpack.c.b16 %v403, %v401
  %v548 = vpack.c.b16 %v404, %v402
  %v549 = vpack.c.b16 %v407, %v405
  %v550 = vpack.c.b16 %v408, %v406
  %v551 = vpack.c.b16 %v411, %v409
  %v552 = vpack.c.b16 %v412, %v410
  %v553 = vpack.c.b16 %v415, %v413
  %v554 = vpack.c.b16 %v416, %v414
  %v555 = vpack.c.b16 %v419, %v417
  %v556 = vpack.c.b16 %v420, %v418
  %v557 = vpack.c.b16 %v423, %v421
  %v558 = vpack.c.b16 %v424, %v422
  %v559 = vpack.c.b16 %v427, %v425
  %v560 = vpack.c.b16 %v428, %v426
  %v561 = vpack.c.b16 %v431, %v429
  %v562 = vpack.c.b16 %v432, %v430
  %v563 = vpack.c.b16 %v435, %v433
  %v564 = vpack.c.b16 %v436, %v434
  %v565 = vpack.c.b16 %v439, %v437
  %v566 = vpack.c.b16 %v440, %v438
  %v567 = vpack.c.b16 %v443, %v441
  %v568 = vpack.c.b16 %v444, %v442
  %v569 = vpack.c.b16 %v447, %v445
  %v570 = vpack.c.b16 %v448, %v446
  %v571 = vpack.c.b16 %v451, %v449
  %v572 = vpack.c.b16 %v452, %v450
  %v573 = vpack.c.b16 %v455, %v453
  %v574 = vpack.c.b16 %v456, %v454
  %v575 = vpack.c.b16 %v459, %v457
  %v576 = vpack.c.b16 %v460, %v458
  %v577 = vpack.c.b16 %v463, %v461
  %v578 = vpack.c.b16 %v464, %v462
  %v579 = vpack.c.b16 %v467, %v465
  %v580 = vpack.c.b16 %v468, %v466
  %v581 = vpack.c.b16 %v471, %v469
  %v582 = vpack.c.b16 %v472, %v470
  %v583 = vpack.c.b16 %v475, %v473
  %v584 = vpack.c.b16 %v476, %v474
  %v585 = vpack.c.b16 %v479, %v477
  %v586 = vpack.c.b16 %v480, %v478
  %v587 = vpack.c.b16 %v483, %v481
  %v588 = vpack.c.b16 %v484, %v482
  %v589 = vpack.c.b16 %v487, %v485
  %v590 = vpack.c.b16 %v488, %v486
  %v591 = vpack.c.b16 %v491, %v489
  %v592 = vpack.c.b16 %v492, %v490
  %v593 = vpack.c.b16 %v495, %v493
  %v594 = vpack.c.b16 %v496, %v494
  %vm693 = vcmask 130048
  %v695 = vsel %vm693, %v196, 0
  %697 = vmatprep.subr.bf16.mxu0 %v512
  %698 = vmatpush1.bf16.msra.mxu0 %v511
  %699 = vmatprep.subr.bf16.mxu0 %v510
  %700 = vmatpush1.bf16.msra.mxu0 %v509
  %701 = vmatprep.subr.bf16.mxu0 %v508
  %702 = vmatpush1.bf16.msra.mxu0 %v507
  %703 = vmatprep.subr.bf16.mxu0 %v506
  %704 = vmatpush1.bf16.msra.mxu0 %v505
  %705 = vmatprep.subr.bf16.mxu0 %v504
  %706 = vmatpush1.bf16.msra.mxu0 %v503
  %707 = vmatprep.subr.bf16.mxu0 %v502
  %708 = vmatpush1.bf16.msra.mxu0 %v501
  %709 = vmatprep.subr.bf16.mxu0 %v500
  %710 = vmatpush1.bf16.msra.mxu0 %v499
  %711 = vmatprep.subr.bf16.mxu0 %v498
  %712 = vmatpush1.bf16.msra.mxu0 %v497
  %713 = vmatprep.subr.bf16.mxu0 %v528
  %714 = vmatpush2.bf16.msra.mxu0 %v527
  %715 = vmatprep.subr.bf16.mxu0 %v526
  %716 = vmatpush2.bf16.msra.mxu0 %v525
  %717 = vmatprep.subr.bf16.mxu0 %v524
  %718 = vmatpush2.bf16.msra.mxu0 %v523
  %719 = vmatprep.subr.bf16.mxu0 %v522
  %720 = vmatpush2.bf16.msra.mxu0 %v521
  %721 = vmatprep.subr.bf16.mxu0 %v520
  %722 = vmatpush2.bf16.msra.mxu0 %v519
  %723 = vmatprep.subr.bf16.mxu0 %v518
  %724 = vmatpush2.bf16.msra.mxu0 %v517
  %725 = vmatprep.subr.bf16.mxu0 %v516
  %726 = vmatpush2.bf16.msra.mxu0 %v515
  %727 = vmatprep.subr.bf16.mxu0 %v514
  %728 = vmatpush2.bf16.msra.mxu0 %v513
  %729 = vmatprep.mubr.bf16.mxu0 %v191
  %730 = vmatmul.mubr.bf16.gmra.mxu0 %v190
  %v731 = vpop.f32.mrf.mxu0
  %v732 = vadd.f32 %v161, %v731
  %v733 = vpop.f32.mrf.mxu0
  %v734 = vadd.f32 %v165, %v733
  %v735 = vpop.f32.mrf.mxu0
  %v736 = vadd.f32 %v161, %v735
  %v737 = vpop.f32.mrf.mxu0
  %v738 = vadd.f32 %v165, %v737
  %739 = vdwg.mxu0
  %740 = vmatprep.subr.bf16.mxu0 %v544
  %741 = vmatpush1.bf16.msra.mxu0 %v543
  %742 = vmatprep.subr.bf16.mxu0 %v542
  %743 = vmatpush1.bf16.msra.mxu0 %v541
  %744 = vmatprep.subr.bf16.mxu0 %v540
  %745 = vmatpush1.bf16.msra.mxu0 %v539
  %746 = vmatprep.subr.bf16.mxu0 %v538
  %747 = vmatpush1.bf16.msra.mxu0 %v537
  %748 = vmatprep.subr.bf16.mxu0 %v536
  %749 = vmatpush1.bf16.msra.mxu0 %v535
  %750 = vmatprep.subr.bf16.mxu0 %v534
  %751 = vmatpush1.bf16.msra.mxu0 %v533
  %752 = vmatprep.subr.bf16.mxu0 %v532
  %753 = vmatpush1.bf16.msra.mxu0 %v531
  %754 = vmatprep.subr.bf16.mxu0 %v530
  %755 = vmatpush1.bf16.msra.mxu0 %v529
  %756 = vmatprep.subr.bf16.mxu0 %v560
  %757 = vmatpush2.bf16.msra.mxu0 %v559
  %758 = vmatprep.subr.bf16.mxu0 %v558
  %759 = vmatpush2.bf16.msra.mxu0 %v557
  %760 = vmatprep.subr.bf16.mxu0 %v556
  %761 = vmatpush2.bf16.msra.mxu0 %v555
  %762 = vmatprep.subr.bf16.mxu0 %v554
  %763 = vmatpush2.bf16.msra.mxu0 %v553
  %764 = vmatprep.subr.bf16.mxu0 %v552
  %765 = vmatpush2.bf16.msra.mxu0 %v551
  %766 = vmatprep.subr.bf16.mxu0 %v550
  %767 = vmatpush2.bf16.msra.mxu0 %v549
  %768 = vmatprep.subr.bf16.mxu0 %v548
  %769 = vmatpush2.bf16.msra.mxu0 %v547
  %770 = vmatprep.subr.bf16.mxu0 %v546
  %771 = vmatpush2.bf16.msra.mxu0 %v545
  %772 = vmatprep.mubr.bf16.mxu0 %v193
  %773 = vmatmul.mubr.bf16.gmra.mxu0 %v192
  %v774 = vpop.f32.mrf.mxu0
  %v775 = vadd.f32 %v732, %v774
  %v776 = vpop.f32.mrf.mxu0
  %v777 = vadd.f32 %v734, %v776
  %v778 = vpop.f32.mrf.mxu0
  %v779 = vadd.f32 %v736, %v778
  %v780 = vpop.f32.mrf.mxu0
  %v781 = vadd.f32 %v738, %v780
  %782 = vdwg.mxu0
  %783 = vmatprep.subr.bf16.mxu0 %v576
  %784 = vmatpush1.bf16.msra.mxu0 %v575
  %785 = vmatprep.subr.bf16.mxu0 %v574
  %786 = vmatpush1.bf16.msra.mxu0 %v573
  %787 = vmatprep.subr.bf16.mxu0 %v572
  %788 = vmatpush1.bf16.msra.mxu0 %v571
  %789 = vmatprep.subr.bf16.mxu0 %v570
  %790 = vmatpush1.bf16.msra.mxu0 %v569
  %791 = vmatprep.subr.bf16.mxu0 %v568
  %792 = vmatpush1.bf16.msra.mxu0 %v567
  %793 = vmatprep.subr.bf16.mxu0 %v566
  %794 = vmatpush1.bf16.msra.mxu0 %v565
  %795 = vmatprep.subr.bf16.mxu0 %v564
  %796 = vmatpush1.bf16.msra.mxu0 %v563
  %797 = vmatprep.subr.bf16.mxu0 %v562
  %798 = vmatpush1.bf16.msra.mxu0 %v561
  %799 = vmatprep.subr.bf16.mxu0 %v592
  %800 = vmatpush2.bf16.msra.mxu0 %v591
  %801 = vmatprep.subr.bf16.mxu0 %v590
  %802 = vmatpush2.bf16.msra.mxu0 %v589
  %803 = vmatprep.subr.bf16.mxu0 %v588
  %804 = vmatpush2.bf16.msra.mxu0 %v587
  %805 = vmatprep.subr.bf16.mxu0 %v586
  %806 = vmatpush2.bf16.msra.mxu0 %v585
  %807 = vmatprep.subr.bf16.mxu0 %v584
  %808 = vmatpush2.bf16.msra.mxu0 %v583
  %809 = vmatprep.subr.bf16.mxu0 %v582
  %810 = vmatpush2.bf16.msra.mxu0 %v581
  %811 = vmatprep.subr.bf16.mxu0 %v580
  %812 = vmatpush2.bf16.msra.mxu0 %v579
  %813 = vmatprep.subr.bf16.mxu0 %v578
  %814 = vmatpush2.bf16.msra.mxu0 %v577
  %815 = vmatprep.mubr.bf16.mxu0 %v195
  %816 = vmatmul.mubr.bf16.gmra.mxu0 %v194
  %v817 = vpop.f32.mrf.mxu0
  %v818 = vadd.f32 %v775, %v817
  %v819 = vpop.f32.mrf.mxu0
  %v820 = vadd.f32 %v777, %v819
  %v821 = vpop.f32.mrf.mxu0
  %v822 = vadd.f32 %v779, %v821
  %v823 = vpop.f32.mrf.mxu0
  %v824 = vadd.f32 %v781, %v823
  %825 = vdwg.mxu0
  %826 = vmatprep.subr.bf16.mxu0 0
  %827 = vmatpush1.bf16.msra.mxu0 0
  %828 = vmatprep.subr.bf16.mxu0 0
  %829 = vmatpush1.bf16.msra.mxu0 0
  %830 = vmatprep.subr.bf16.mxu0 0
  %831 = vmatpush1.bf16.msra.mxu0 0
  %832 = vmatprep.subr.bf16.mxu0 0
  %833 = vmatpush1.bf16.msra.mxu0 0
  %834 = vmatprep.subr.bf16.mxu0 0
  %835 = vmatpush1.bf16.msra.mxu0 0
  %836 = vmatprep.subr.bf16.mxu0 0
  %837 = vmatpush1.bf16.msra.mxu0 0
  %838 = vmatprep.subr.bf16.mxu0 0
  %839 = vmatpush1.bf16.msra.mxu0 0
  %840 = vmatprep.subr.bf16.mxu0 %v594
  %841 = vmatpush1.bf16.msra.mxu0 %v593
  %842 = vmatprep.subr.bf16.mxu0 0
  %843 = vmatpush2.bf16.msra.mxu0 0
  %844 = vmatprep.subr.bf16.mxu0 0
  %845 = vmatpush2.bf16.msra.mxu0 0
  %846 = vmatprep.subr.bf16.mxu0 0
  %847 = vmatpush2.bf16.msra.mxu0 0
  %848 = vmatprep.subr.bf16.mxu0 0
  %849 = vmatpush2.bf16.msra.mxu0 0
  %850 = vmatprep.subr.bf16.mxu0 0
  %851 = vmatpush2.bf16.msra.mxu0 0
  %852 = vmatprep.subr.bf16.mxu0 0
  %853 = vmatpush2.bf16.msra.mxu0 0
  %854 = vmatprep.subr.bf16.mxu0 0
  %855 = vmatpush2.bf16.msra.mxu0 0
  %856 = vmatprep.subr.bf16.mxu0 0
  %857 = vmatpush2.bf16.msra.mxu0 0
  %858 = vmatprep.mubr.bf16.mxu0 0
  %859 = vmatmul.mubr.bf16.gmra.mxu0 %v695
  %v860 = vpop.f32.mrf.mxu0
  %v861 = vadd.f32 %v818, %v860
  %v862 = vpop.f32.mrf.mxu0
  %v863 = vadd.f32 %v820, %v862
  %v864 = vpop.f32.mrf.mxu0
  %v865 = vadd.f32 %v822, %v864
  %v866 = vpop.f32.mrf.mxu0
  %v867 = vadd.f32 %v824, %v866
  %868 = vdwg.mxu0
  %v869 = vmax.f32 %v861, 0.0
  %v870 = vmax.f32 %v863, 0.0
  %v871 = vmax.f32 %v865, 0.0
  %v872 = vmax.f32 %v867, 0.0
  %v873 = vpack.c.bf16 %v871, %v869
  %v874 = vpack.c.bf16 %v872, %v870
  %v875 = vld [vmem:[%s4] sm:$0xf]
  %v876 = vld [vmem:[%s4 + $0x4] sm:$0xf]
  %v877 = vld [vmem:[%s4 + $0x8] sm:$0xf]
  %v878 = vld [vmem:[%s4 + $0xc] sm:$0xf]
  %v879 = vld [vmem:[%s4 + $0x10] sm:$0xf]
  %v880 = vld [vmem:[%s4 + $0x14] sm:$0xf]
  %v881 = vld [vmem:[%s4 + $0x18] sm:$0xf]
  %v882 = vld [vmem:[%s4 + $0x1c] sm:$0xf]
  %v883 = vld [vmem:[%s4 + $0x20] sm:$0xf]
  %v884 = vld [vmem:[%s4 + $0x24] sm:$0xf]
  %v885 = vld [vmem:[%s4 + $0x28] sm:$0xf]
  %v886 = vld [vmem:[%s4 + $0x2c] sm:$0xf]
  %v887 = vld [vmem:[%s4 + $0x30] sm:$0xf]
  %v888 = vld [vmem:[%s4 + $0x34] sm:$0xf]
  %v889 = vld [vmem:[%s4 + $0x38] sm:$0xf]
  %v890 = vld [vmem:[%s4 + $0x3c] sm:$0xf]
  %v891 = vld [vmem:[%s4 + $0x40] sm:$0xf]
  %v892 = vld [vmem:[%s4 + $0x44] sm:$0xf]
  %v893 = vld [vmem:[%s4 + $0x48] sm:$0xf]
  %v894 = vld [vmem:[%s4 + $0x4c] sm:$0xf]
  %v895 = vld [vmem:[%s4 + $0x50] sm:$0xf]
  %v896 = vld [vmem:[%s4 + $0x54] sm:$0xf]
  %v897 = vld [vmem:[%s4 + $0x58] sm:$0xf]
  %v898 = vld [vmem:[%s4 + $0x5c] sm:$0xf]
  %v899 = vld [vmem:[%s4 + $0x60] sm:$0xf]
  %v900 = vld [vmem:[%s4 + $0x64] sm:$0xf]
  %v901 = vld [vmem:[%s4 + $0x68] sm:$0xf]
  %v902 = vld [vmem:[%s4 + $0x6c] sm:$0xf]
  %v903 = vld [vmem:[%s4 + $0x70] sm:$0xf]
  %v904 = vld [vmem:[%s4 + $0x74] sm:$0xf]
  %v905 = vld [vmem:[%s4 + $0x78] sm:$0xf]
  %v906 = vld [vmem:[%s4 + $0x7c] sm:$0xf]
  %v907 = vld [vmem:[%s5] sm:$0x1]
  %v909 = vlaneseq
  %v910 = vshrl.u32 %v909, 7
  %v911 = vsub.s32 0, %v910
  %v912 = vrot.slane %v907, %v911
  %v946 = vunpack.c.l.b16 %v875
  %v947 = vunpack.c.l.b16 %v876
  %v948 = vunpack.c.l.b16 %v877
  %v949 = vunpack.c.l.b16 %v878
  %v950 = vunpack.c.l.b16 %v879
  %v951 = vunpack.c.l.b16 %v880
  %v952 = vunpack.c.l.b16 %v881
  %v953 = vunpack.c.l.b16 %v882
  %v954 = vunpack.c.l.b16 %v883
  %v955 = vunpack.c.l.b16 %v884
  %v956 = vunpack.c.l.b16 %v885
  %v957 = vunpack.c.l.b16 %v886
  %v958 = vunpack.c.l.b16 %v887
  %v959 = vunpack.c.l.b16 %v888
  %v960 = vunpack.c.l.b16 %v889
  %v961 = vunpack.c.l.b16 %v890
  %v962 = vunpack.c.l.b16 %v891
  %v963 = vunpack.c.l.b16 %v892
  %v964 = vunpack.c.l.b16 %v893
  %v965 = vunpack.c.l.b16 %v894
  %v966 = vunpack.c.l.b16 %v895
  %v967 = vunpack.c.l.b16 %v896
  %v968 = vunpack.c.l.b16 %v897
  %v969 = vunpack.c.l.b16 %v898
  %v970 = vunpack.c.l.b16 %v899
  %v971 = vunpack.c.l.b16 %v900
  %v972 = vunpack.c.l.b16 %v901
  %v973 = vunpack.c.l.b16 %v902
  %v974 = vunpack.c.l.b16 %v903
  %v975 = vunpack.c.l.b16 %v904
  %v976 = vunpack.c.l.b16 %v905
  %v977 = vunpack.c.l.b16 %v906
  %v978 = vpack.c.b16 %v947, %v946
  %v979 = vpack.c.b16 %v949, %v948
  %v980 = vpack.c.b16 %v951, %v950
  %v981 = vpack.c.b16 %v953, %v952
  %v982 = vpack.c.b16 %v955, %v954
  %v983 = vpack.c.b16 %v957, %v956
  %v984 = vpack.c.b16 %v959, %v958
  %v985 = vpack.c.b16 %v961, %v960
  %v986 = vpack.c.b16 %v963, %v962
  %v987 = vpack.c.b16 %v965, %v964
  %v988 = vpack.c.b16 %v967, %v966
  %v989 = vpack.c.b16 %v969, %v968
  %v990 = vpack.c.b16 %v971, %v970
  %v991 = vpack.c.b16 %v973, %v972
  %v992 = vpack.c.b16 %v975, %v974
  %v993 = vpack.c.b16 %v977, %v976
  %1010 = vmatprep.subr.bf16.mxu0 0
  %1011 = vmatpush1.bf16.msra.mxu0 %v985
  %1012 = vmatprep.subr.bf16.mxu0 0
  %1013 = vmatpush1.bf16.msra.mxu0 %v984
  %1014 = vmatprep.subr.bf16.mxu0 0
  %1015 = vmatpush1.bf16.msra.mxu0 %v983
  %1016 = vmatprep.subr.bf16.mxu0 0
  %1017 = vmatpush1.bf16.msra.mxu0 %v982
  %1018 = vmatprep.subr.bf16.mxu0 0
  %1019 = vmatpush1.bf16.msra.mxu0 %v981
  %1020 = vmatprep.subr.bf16.mxu0 0
  %1021 = vmatpush1.bf16.msra.mxu0 %v980
  %1022 = vmatprep.subr.bf16.mxu0 0
  %1023 = vmatpush1.bf16.msra.mxu0 %v979
  %1024 = vmatprep.subr.bf16.mxu0 0
  %1025 = vmatpush1.bf16.msra.mxu0 %v978
  %1026 = vmatprep.subr.bf16.mxu0 0
  %1027 = vmatpush2.bf16.msra.mxu0 %v993
  %1028 = vmatprep.subr.bf16.mxu0 0
  %1029 = vmatpush2.bf16.msra.mxu0 %v992
  %1030 = vmatprep.subr.bf16.mxu0 0
  %1031 = vmatpush2.bf16.msra.mxu0 %v991
  %1032 = vmatprep.subr.bf16.mxu0 0
  %1033 = vmatpush2.bf16.msra.mxu0 %v990
  %1034 = vmatprep.subr.bf16.mxu0 0
  %1035 = vmatpush2.bf16.msra.mxu0 %v989
  %1036 = vmatprep.subr.bf16.mxu0 0
  %1037 = vmatpush2.bf16.msra.mxu0 %v988
  %1038 = vmatprep.subr.bf16.mxu0 0
  %1039 = vmatpush2.bf16.msra.mxu0 %v987
  %1040 = vmatprep.subr.bf16.mxu0 0
  %1041 = vmatpush2.bf16.msra.mxu0 %v986
  %1042 = vmatprep.mubr.bf16.mxu0 %v874
  %1043 = vmatmul.mubr.bf16.gmra.mxu0 %v873
  %v1044 = vpop.f32.mrf.mxu0
  %v1045 = vadd.f32 %v912, %v1044
  %v1046 = vpop.f32.mrf.mxu0
  %v1047 = vpop.f32.mrf.mxu0
  %v1048 = vadd.f32 %v912, %v1047
  %v1049 = vpop.f32.mrf.mxu0
  %1050 = vdwg.mxu0
  %v1051 = vmax.f32 %v1045, 0.0
  %v1052 = vmax.f32 %v1048, 0.0
  %v1053 = vpack.c.bf16 %v1052, %v1051
  %v1054 = vld [vmem:[%s6] sm:$0xf]
  %v1055 = vld [vmem:[%s6 + $0x4] sm:$0xf]
  %v1056 = vld [vmem:[%s6 + $0x8] sm:$0xf]
  %v1057 = vld [vmem:[%s6 + $0xc] sm:$0xf]
  %v1058 = vld [vmem:[%s6 + $0x10] sm:$0xf]
  %v1059 = vld [vmem:[%s6 + $0x14] sm:$0xf]
  %v1060 = vld [vmem:[%s6 + $0x18] sm:$0xf]
  %v1061 = vld [vmem:[%s6 + $0x1c] sm:$0xf]
  %v1062 = vld [vmem:[%s7] sm:$0x1]
  %v1064 = vlaneseq
  %v1065 = vshrl.u32 %v1064, 7
  %v1066 = vsub.s32 0, %v1065
  %v1067 = vrot.slane %v1062, %v1066
  %v1077 = vunpack.c.l.b16 %v1054
  %v1078 = vunpack.c.l.b16 %v1055
  %v1079 = vunpack.c.l.b16 %v1056
  %v1080 = vunpack.c.l.b16 %v1057
  %v1081 = vunpack.c.l.b16 %v1058
  %v1082 = vunpack.c.l.b16 %v1059
  %v1083 = vunpack.c.l.b16 %v1060
  %v1084 = vunpack.c.l.b16 %v1061
  %v1085 = vpack.c.b16 %v1078, %v1077
  %v1086 = vpack.c.b16 %v1080, %v1079
  %v1087 = vpack.c.b16 %v1082, %v1081
  %v1088 = vpack.c.b16 %v1084, %v1083
  %vm1093 = vcmask 523264
  %v1095 = vsel %vm1093, %v1053, 0
  %1097 = vmatprep.subr.bf16.mxu0 0
  %1098 = vmatpush1.bf16.msra.mxu0 0
  %1099 = vmatprep.subr.bf16.mxu0 0
  %1100 = vmatpush1.bf16.msra.mxu0 0
  %1101 = vmatprep.subr.bf16.mxu0 0
  %1102 = vmatpush1.bf16.msra.mxu0 0
  %1103 = vmatprep.subr.bf16.mxu0 0
  %1104 = vmatpush1.bf16.msra.mxu0 0
  %1105 = vmatprep.subr.bf16.mxu0 0
  %1106 = vmatpush1.bf16.msra.mxu0 %v1088
  %1107 = vmatprep.subr.bf16.mxu0 0
  %1108 = vmatpush1.bf16.msra.mxu0 %v1087
  %1109 = vmatprep.subr.bf16.mxu0 0
  %1110 = vmatpush1.bf16.msra.mxu0 %v1086
  %1111 = vmatprep.subr.bf16.mxu0 0
  %1112 = vmatpush1.bf16.msra.mxu0 %v1085
  %1113 = vmatprep.subr.bf16.mxu0 0
  %1114 = vmatpush2.bf16.msra.mxu0 0
  %1115 = vmatprep.subr.bf16.mxu0 0
  %1116 = vmatpush2.bf16.msra.mxu0 0
  %1117 = vmatprep.subr.bf16.mxu0 0
  %1118 = vmatpush2.bf16.msra.mxu0 0
  %1119 = vmatprep.subr.bf16.mxu0 0
  %1120 = vmatpush2.bf16.msra.mxu0 0
  %1121 = vmatprep.subr.bf16.mxu0 0
  %1122 = vmatpush2.bf16.msra.mxu0 0
  %1123 = vmatprep.subr.bf16.mxu0 0
  %1124 = vmatpush2.bf16.msra.mxu0 0
  %1125 = vmatprep.subr.bf16.mxu0 0
  %1126 = vmatpush2.bf16.msra.mxu0 0
  %1127 = vmatprep.subr.bf16.mxu0 0
  %1128 = vmatpush2.bf16.msra.mxu0 0
  %1129 = vmatprep.mubr.bf16.mxu0 0
  %1130 = vmatmul.mubr.bf16.gmra.mxu0 %v1095
  %v1131 = vpop.f32.mrf.mxu0
  %v1132 = vadd.f32 %v1067, %v1131
  %v1133 = vpop.f32.mrf.mxu0
  %v1134 = vpop.f32.mrf.mxu0
  %v1135 = vadd.f32 %v1067, %v1134
  %v1136 = vpop.f32.mrf.mxu0
  %1137 = vdwg.mxu0
  %v1138 = vmax.f32 %v1132, 0.0
  %v1139 = vmax.f32 %v1135, 0.0
  %v1140 = vld [vmem:[%s1] sm:$0xff]
  %v1141 = vld [vmem:[%s1 + $0x8] sm:$0xff]
  %1144 = vrot.lane.b32.xlu0 %v1140, 10
  %v1145 = vpop.permute.xlu0 %1144
  %1146 = vrot.lane.b32.xlu0 %v1141, 10
  %v1147 = vpop.permute.xlu0 %1146
  %v1150 = vmul.f32 %v1138, %v1145
  %v1151 = vmul.f32 %v1139, %v1147
  %1154 = vrot.lane.b32.xlu0 %v1150, 118
  %v1155 = vpop.permute.xlu0 %1154
  %1156 = vrot.lane.b32.xlu0 %v1151, 118
  %v1157 = vpop.permute.xlu0 %1156
  %v1160 = vadd.f32 %v1138, %v1155
  %v1161 = vadd.f32 %v1139, %v1157
  %v1162 = vpack.c.bf16 %v1161, %v1160
  %v1163 = vld [vmem:[%s8] sm:$0xf]
  %v1164 = vld [vmem:[%s8 + $0x4] sm:$0x1]
  %v1165 = vld [vmem:[%s9] sm:$0x1]
  %v1167 = vlaneseq
  %v1168 = vshrl.u32 %v1167, 7
  %v1169 = vsub.s32 0, %v1168
  %v1170 = vrot.slane %v1165, %v1169
  %v1174 = vunpack.c.l.b16 %v1163
  %v1175 = vunpack.c.l.b16 %v1164
  %v1176 = vpack.c.b16 %v1175, %v1174
  %vm1177 = vcmask 80896
  %v1179 = vsel %vm1177, %v1162, 0
  %vm1181 = vcmask 1044480
  %v1183 = vsel %vm1181, %v1176, 0
  %1185 = vmatprep.subr.bf16.mxu0 0
  %1186 = vmatpush1.bf16.msra.mxu0 0
  %1187 = vmatprep.subr.bf16.mxu0 0
  %1188 = vmatpush1.bf16.msra.mxu0 0
  %1189 = vmatprep.subr.bf16.mxu0 0
  %1190 = vmatpush1.bf16.msra.mxu0 0
  %1191 = vmatprep.subr.bf16.mxu0 0
  %1192 = vmatpush1.bf16.msra.mxu0 0
  %1193 = vmatprep.subr.bf16.mxu0 0
  %1194 = vmatpush1.bf16.msra.mxu0 0
  %1195 = vmatprep.subr.bf16.mxu0 0
  %1196 = vmatpush1.bf16.msra.mxu0 0
  %1197 = vmatprep.subr.bf16.mxu0 0
  %1198 = vmatpush1.bf16.msra.mxu0 0
  %1199 = vmatprep.subr.bf16.mxu0 0
  %1200 = vmatpush1.bf16.msra.mxu0 %v1183
  %1201 = vmatprep.subr.bf16.mxu0 0
  %1202 = vmatpush2.bf16.msra.mxu0 0
  %1203 = vmatprep.subr.bf16.mxu0 0
  %1204 = vmatpush2.bf16.msra.mxu0 0
  %1205 = vmatprep.subr.bf16.mxu0 0
  %1206 = vmatpush2.bf16.msra.mxu0 0
  %1207 = vmatprep.subr.bf16.mxu0 0
  %1208 = vmatpush2.bf16.msra.mxu0 0
  %1209 = vmatprep.subr.bf16.mxu0 0
  %1210 = vmatpush2.bf16.msra.mxu0 0
  %1211 = vmatprep.subr.bf16.mxu0 0
  %1212 = vmatpush2.bf16.msra.mxu0 0
  %1213 = vmatprep.subr.bf16.mxu0 0
  %1214 = vmatpush2.bf16.msra.mxu0 0
  %1215 = vmatprep.subr.bf16.mxu0 0
  %1216 = vmatpush2.bf16.msra.mxu0 0
  %1217 = vmatprep.mubr.bf16.mxu0 0
  %1218 = vmatmul.mubr.bf16.gmra.mxu0 %v1179
  %v1219 = vpop.f32.mrf.mxu0
  %v1220 = vadd.f32 %v1170, %v1219
  %v1221 = vpop.f32.mrf.mxu0
  %v1222 = vpop.f32.mrf.mxu0
  %v1223 = vadd.f32 %v1170, %v1222
  %v1224 = vpop.f32.mrf.mxu0
  %1225 = vdwg.mxu0
  %v1226 = vmax.f32 %v1220, 0.0
  %v1227 = vmax.f32 %v1223, 0.0
  %v1228 = vpack.c.bf16 %v1227, %v1226
  %v1229 = vld [vmem:[%s10] sm:$0xff]
  %v1230 = vld [vmem:[%s10 + $0x8] sm:$0xff]
  %v1231 = vld [vmem:[%s10 + $0x10] sm:$0xff]
  %v1232 = vld [vmem:[%s10 + $0x18] sm:$0xff]
  %v1233 = vld [vmem:[%s10 + $0x20] sm:$0xff]
  %v1234 = vld [vmem:[%s10 + $0x28] sm:$0xff]
  %v1235 = vld [vmem:[%s10 + $0x30] sm:$0xff]
  %v1236 = vld [vmem:[%s10 + $0x38] sm:$0xff]
  %v1237 = vld [vmem:[%s11] sm:$0x3]
  %v1239 = vlaneseq
  %v1240 = vshrl.u32 %v1239, 7
  %v1241 = vsub.s32 0, %v1240
  %v1242 = vrot.slane %v1237, %v1241
  %v1243 = vlaneseq
  %v1244 = vshrl.u32 %v1243, 7
  %v1245 = vsub.s32 1, %v1244
  %v1246 = vrot.slane %v1237, %v1245
  %v1257 = vunpack.c.l.b16 %v1229
  %v1258 = vunpack.c.h.b16 %v1229
  %v1259 = vunpack.c.l.b16 %v1230
  %v1260 = vunpack.c.h.b16 %v1230
  %v1261 = vunpack.c.l.b16 %v1231
  %v1262 = vunpack.c.h.b16 %v1231
  %v1263 = vunpack.c.l.b16 %v1232
  %v1264 = vunpack.c.h.b16 %v1232
  %v1265 = vunpack.c.l.b16 %v1233
  %v1266 = vunpack.c.h.b16 %v1233
  %v1267 = vunpack.c.l.b16 %v1234
  %v1268 = vunpack.c.h.b16 %v1234
  %v1269 = vunpack.c.l.b16 %v1235
  %v1270 = vunpack.c.h.b16 %v1235
  %v1271 = vunpack.c.l.b16 %v1236
  %v1272 = vunpack.c.h.b16 %v1236
  %v1273 = vpack.c.b16 %v1259, %v1257
  %v1274 = vpack.c.b16 %v1260, %v1258
  %v1275 = vpack.c.b16 %v1263, %v1261
  %v1276 = vpack.c.b16 %v1264, %v1262
  %v1277 = vpack.c.b16 %v1267, %v1265
  %v1278 = vpack.c.b16 %v1268, %v1266
  %v1279 = vpack.c.b16 %v1271, %v1269
  %v1280 = vpack.c.b16 %v1272, %v1270
  %v1290 = vsel %vm1093, %v1228, 0
  %1292 = vmatprep.subr.bf16.mxu0 0
  %1293 = vmatpush1.bf16.msra.mxu0 0
  %1294 = vmatprep.subr.bf16.mxu0 0
  %1295 = vmatpush1.bf16.msra.mxu0 0
  %1296 = vmatprep.subr.bf16.mxu0 0
  %1297 = vmatpush1.bf16.msra.mxu0 0
  %1298 = vmatprep.subr.bf16.mxu0 0
  %1299 = vmatpush1.bf16.msra.mxu0 0
  %1300 = vmatprep.subr.bf16.mxu0 %v1280
  %1301 = vmatpush1.bf16.msra.mxu0 %v1279
  %1302 = vmatprep.subr.bf16.mxu0 %v1278
  %1303 = vmatpush1.bf16.msra.mxu0 %v1277
  %1304 = vmatprep.subr.bf16.mxu0 %v1276
  %1305 = vmatpush1.bf16.msra.mxu0 %v1275
  %1306 = vmatprep.subr.bf16.mxu0 %v1274
  %1307 = vmatpush1.bf16.msra.mxu0 %v1273
  %1308 = vmatprep.subr.bf16.mxu0 0
  %1309 = vmatpush2.bf16.msra.mxu0 0
  %1310 = vmatprep.subr.bf16.mxu0 0
  %1311 = vmatpush2.bf16.msra.mxu0 0
  %1312 = vmatprep.subr.bf16.mxu0 0
  %1313 = vmatpush2.bf16.msra.mxu0 0
  %1314 = vmatprep.subr.bf16.mxu0 0
  %1315 = vmatpush2.bf16.msra.mxu0 0
  %1316 = vmatprep.subr.bf16.mxu0 0
  %1317 = vmatpush2.bf16.msra.mxu0 0
  %1318 = vmatprep.subr.bf16.mxu0 0
  %1319 = vmatpush2.bf16.msra.mxu0 0
  %1320 = vmatprep.subr.bf16.mxu0 0
  %1321 = vmatpush2.bf16.msra.mxu0 0
  %1322 = vmatprep.subr.bf16.mxu0 0
  %1323 = vmatpush2.bf16.msra.mxu0 0
  %1324 = vmatprep.mubr.bf16.mxu0 0
  %1325 = vmatmul.mubr.bf16.gmra.mxu0 %v1290
  %v1326 = vpop.f32.mrf.mxu0
  %v1327 = vadd.f32 %v1242, %v1326
  %v1328 = vpop.f32.mrf.mxu0
  %v1329 = vadd.f32 %v1246, %v1328
  %v1330 = vpop.f32.mrf.mxu0
  %v1331 = vadd.f32 %v1242, %v1330
  %v1332 = vpop.f32.mrf.mxu0
  %v1333 = vadd.f32 %v1246, %v1332
  %1334 = vdwg.mxu0
  %v1335 = vmax.f32 %v1327, 0.0
  %v1336 = vmax.f32 %v1329, 0.0
  %v1337 = vmax.f32 %v1331, 0.0
  %v1338 = vmax.f32 %v1333, 0.0
  %v1339 = vpack.c.bf16 %v1337, %v1335
  %v1340 = vpack.c.bf16 %v1338, %v1336
  %v1341 = vld [vmem:[%s12] sm:$0xff]
  %v1342 = vld [vmem:[%s12 + $0x8] sm:$0xff]
  %v1343 = vld [vmem:[%s12 + $0x10] sm:$0xff]
  %v1344 = vld [vmem:[%s12 + $0x18] sm:$0xf]
  %v1345 = vld [vmem:[%s12 + $0x1c] sm:$0xff]
  %v1346 = vld [vmem:[%s12 + $0x24] sm:$0xff]
  %v1347 = vld [vmem:[%s12 + $0x2c] sm:$0xff]
  %v1348 = vld [vmem:[%s12 + $0x34] sm:$0xf]
  %v1349 = vld [vmem:[%s12 + $0x38] sm:$0xff]
  %v1350 = vld [vmem:[%s12 + $0x40] sm:$0xff]
  %v1351 = vld [vmem:[%s12 + $0x48] sm:$0xff]
  %v1352 = vld [vmem:[%s12 + $0x50] sm:$0xf]
  %v1353 = vld [vmem:[%s12 + $0x54] sm:$0xff]
  %v1354 = vld [vmem:[%s12 + $0x5c] sm:$0xff]
  %v1355 = vld [vmem:[%s12 + $0x64] sm:$0xff]
  %v1356 = vld [vmem:[%s12 + $0x6c] sm:$0xf]
  %v1357 = vld [vmem:[%s12 + $0x70] sm:$0xff]
  %v1358 = vld [vmem:[%s12 + $0x78] sm:$0xff]
  %v1359 = vld [vmem:[%s12 + $0x80] sm:$0xff]
  %v1360 = vld [vmem:[%s12 + $0x88] sm:$0xf]
  %v1361 = vld [vmem:[%s12 + $0x8c] sm:$0xff]
  %v1362 = vld [vmem:[%s12 + $0x94] sm:$0xff]
  %v1363 = vld [vmem:[%s12 + $0x9c] sm:$0xff]
  %v1364 = vld [vmem:[%s12 + $0xa4] sm:$0xf]
  %v1365 = vld [vmem:[%s12 + $0xa8] sm:$0xff]
  %v1366 = vld [vmem:[%s12 + $0xb0] sm:$0xff]
  %v1367 = vld [vmem:[%s12 + $0xb8] sm:$0xff]
  %v1368 = vld [vmem:[%s12 + $0xc0] sm:$0xf]
  %v1369 = vld [vmem:[%s12 + $0xc4] sm:$0xff]
  %v1370 = vld [vmem:[%s12 + $0xcc] sm:$0xff]
  %v1371 = vld [vmem:[%s12 + $0xd4] sm:$0xff]
  %v1372 = vld [vmem:[%s12 + $0xdc] sm:$0xf]
  %v1373 = vld [vmem:[%s12 + $0xe0] sm:$0xff]
  %v1374 = vld [vmem:[%s12 + $0xe8] sm:$0xff]
  %v1375 = vld [vmem:[%s12 + $0xf0] sm:$0xff]
  %v1376 = vld [vmem:[%s12 + $0xf8] sm:$0xf]
  %v1377 = vld [vmem:[%s12 + $0xfc] sm:$0xff]
  %v1378 = vld [vmem:[%s12 + $0x104] sm:$0xff]
  %v1379 = vld [vmem:[%s12 + $0x10c] sm:$0xff]
  %v1380 = vld [vmem:[%s12 + $0x114] sm:$0xf]
  %v1381 = vld [vmem:[%s12 + $0x118] sm:$0xff]
  %v1382 = vld [vmem:[%s12 + $0x120] sm:$0xff]
  %v1383 = vld [vmem:[%s12 + $0x128] sm:$0xff]
  %v1384 = vld [vmem:[%s12 + $0x130] sm:$0xf]
  %v1385 = vld [vmem:[%s12 + $0x134] sm:$0xff]
  %v1386 = vld [vmem:[%s12 + $0x13c] sm:$0xff]
  %v1387 = vld [vmem:[%s12 + $0x144] sm:$0xff]
  %v1388 = vld [vmem:[%s12 + $0x14c] sm:$0xf]
  %v1389 = vld [vmem:[%s12 + $0x150] sm:$0xff]
  %v1390 = vld [vmem:[%s12 + $0x158] sm:$0xff]
  %v1391 = vld [vmem:[%s12 + $0x160] sm:$0xff]
  %v1392 = vld [vmem:[%s12 + $0x168] sm:$0xf]
  %v1393 = vld [vmem:[%s12 + $0x16c] sm:$0xff]
  %v1394 = vld [vmem:[%s12 + $0x174] sm:$0xff]
  %v1395 = vld [vmem:[%s12 + $0x17c] sm:$0xff]
  %v1396 = vld [vmem:[%s12 + $0x184] sm:$0xf]
  %v1397 = vld [vmem:[%s12 + $0x188] sm:$0xff]
  %v1398 = vld [vmem:[%s12 + $0x190] sm:$0xff]
  %v1399 = vld [vmem:[%s12 + $0x198] sm:$0xff]
  %v1400 = vld [vmem:[%s12 + $0x1a0] sm:$0xf]
  %v1401 = vld [vmem:[%s12 + $0x1a4] sm:$0xff]
  %v1402 = vld [vmem:[%s12 + $0x1ac] sm:$0xff]
  %v1403 = vld [vmem:[%s12 + $0x1b4] sm:$0xff]
  %v1404 = vld [vmem:[%s12 + $0x1bc] sm:$0xf]
  %v1405 = vld [vmem:[%s12 + $0x1c0] sm:$0xff]
  %v1406 = vld [vmem:[%s12 + $0x1c8] sm:$0xff]
  %v1407 = vld [vmem:[%s12 + $0x1d0] sm:$0xff]
  %v1408 = vld [vmem:[%s12 + $0x1d8] sm:$0xf]
  %v1409 = vld [vmem:[%s12 + $0x1dc] sm:$0xff]
  %v1410 = vld [vmem:[%s12 + $0x1e4] sm:$0xff]
  %v1411 = vld [vmem:[%s12 + $0x1ec] sm:$0xff]
  %v1412 = vld [vmem:[%s12 + $0x1f4] sm:$0xf]
  %v1413 = vld [vmem:[%s12 + $0x1f8] sm:$0xff]
  %v1414 = vld [vmem:[%s12 + $0x200] sm:$0xff]
  %v1415 = vld [vmem:[%s12 + $0x208] sm:$0xff]
  %v1416 = vld [vmem:[%s12 + $0x210] sm:$0xf]
  %v1417 = vld [vmem:[%s12 + $0x214] sm:$0xff]
  %v1418 = vld [vmem:[%s12 + $0x21c] sm:$0xff]
  %v1419 = vld [vmem:[%s12 + $0x224] sm:$0xff]
  %v1420 = vld [vmem:[%s12 + $0x22c] sm:$0xf]
  %v1421 = vld [vmem:[%s12 + $0x230] sm:$0xff]
  %v1422 = vld [vmem:[%s12 + $0x238] sm:$0xff]
  %v1423 = vld [vmem:[%s12 + $0x240] sm:$0xff]
  %v1424 = vld [vmem:[%s12 + $0x248] sm:$0xf]
  %v1425 = vld [vmem:[%s12 + $0x24c] sm:$0xff]
  %v1426 = vld [vmem:[%s12 + $0x254] sm:$0xff]
  %v1427 = vld [vmem:[%s12 + $0x25c] sm:$0xff]
  %v1428 = vld [vmem:[%s12 + $0x264] sm:$0xf]
  %v1429 = vld [vmem:[%s12 + $0x268] sm:$0xff]
  %v1430 = vld [vmem:[%s12 + $0x270] sm:$0xff]
  %v1431 = vld [vmem:[%s12 + $0x278] sm:$0xff]
  %v1432 = vld [vmem:[%s12 + $0x280] sm:$0xf]
  %v1433 = vld [vmem:[%s12 + $0x284] sm:$0xff]
  %v1434 = vld [vmem:[%s12 + $0x28c] sm:$0xff]
  %v1435 = vld [vmem:[%s12 + $0x294] sm:$0xff]
  %v1436 = vld [vmem:[%s12 + $0x29c] sm:$0xf]
  %v1437 = vld [vmem:[%s12 + $0x2a0] sm:$0xff]
  %v1438 = vld [vmem:[%s12 + $0x2a8] sm:$0xff]
  %v1439 = vld [vmem:[%s12 + $0x2b0] sm:$0xff]
  %v1440 = vld [vmem:[%s12 + $0x2b8] sm:$0xf]
  %v1441 = vld [vmem:[%s12 + $0x2bc] sm:$0xff]
  %v1442 = vld [vmem:[%s12 + $0x2c4] sm:$0xff]
  %v1443 = vld [vmem:[%s12 + $0x2cc] sm:$0xff]
  %v1444 = vld [vmem:[%s12 + $0x2d4] sm:$0xf]
  %v1445 = vld [vmem:[%s12 + $0x2d8] sm:$0xff]
  %v1446 = vld [vmem:[%s12 + $0x2e0] sm:$0xff]
  %v1447 = vld [vmem:[%s12 + $0x2e8] sm:$0xff]
  %v1448 = vld [vmem:[%s12 + $0x2f0] sm:$0xf]
  %v1449 = vld [vmem:[%s12 + $0x2f4] sm:$0xff]
  %v1450 = vld [vmem:[%s12 + $0x2fc] sm:$0xff]
  %v1451 = vld [vmem:[%s12 + $0x304] sm:$0xff]
  %v1452 = vld [vmem:[%s12 + $0x30c] sm:$0xf]
  %v1453 = vld [vmem:[%s12 + $0x310] sm:$0xff]
  %v1454 = vld [vmem:[%s12 + $0x318] sm:$0xff]
  %v1455 = vld [vmem:[%s12 + $0x320] sm:$0xff]
  %v1456 = vld [vmem:[%s12 + $0x328] sm:$0xf]
  %v1457 = vld [vmem:[%s12 + $0x32c] sm:$0xff]
  %v1458 = vld [vmem:[%s12 + $0x334] sm:$0xff]
  %v1459 = vld [vmem:[%s12 + $0x33c] sm:$0xff]
  %v1460 = vld [vmem:[%s12 + $0x344] sm:$0xf]
  %v1461 = vld [vmem:[%s12 + $0x348] sm:$0xff]
  %v1462 = vld [vmem:[%s12 + $0x350] sm:$0xff]
  %v1463 = vld [vmem:[%s12 + $0x358] sm:$0xff]
  %v1464 = vld [vmem:[%s12 + $0x360] sm:$0xf]
  %v1465 = vld [vmem:[%s12 + $0x364] sm:$0xff]
  %v1466 = vld [vmem:[%s12 + $0x36c] sm:$0xff]
  %v1467 = vld [vmem:[%s12 + $0x374] sm:$0xff]
  %v1468 = vld [vmem:[%s12 + $0x37c] sm:$0xf]
  %v1469 = vld [vmem:[%s13] sm:$0x7f]
  %v1471 = vlaneseq
  %v1472 = vshrl.u32 %v1471, 7
  %v1473 = vsub.s32 0, %v1472
  %v1474 = vrot.slane %v1469, %v1473
  %v1475 = vlaneseq
  %v1476 = vshrl.u32 %v1475, 7
  %v1477 = vsub.s32 1, %v1476
  %v1478 = vrot.slane %v1469, %v1477
  %v1479 = vlaneseq
  %v1480 = vshrl.u32 %v1479, 7
  %v1481 = vsub.s32 2, %v1480
  %v1482 = vrot.slane %v1469, %v1481
  %v1483 = vlaneseq
  %v1484 = vshrl.u32 %v1483, 7
  %v1485 = vsub.s32 3, %v1484
  %v1486 = vrot.slane %v1469, %v1485
  %v1487 = vlaneseq
  %v1488 = vshrl.u32 %v1487, 7
  %v1489 = vsub.s32 4, %v1488
  %v1490 = vrot.slane %v1469, %v1489
  %v1491 = vlaneseq
  %v1492 = vshrl.u32 %v1491, 7
  %v1493 = vsub.s32 5, %v1492
  %v1494 = vrot.slane %v1469, %v1493
  %v1495 = vlaneseq
  %v1496 = vshrl.u32 %v1495, 7
  %v1497 = vsub.s32 6, %v1496
  %v1498 = vrot.slane %v1469, %v1497
  %v1634 = vunpack.c.l.b16 %v1341
  %v1635 = vunpack.c.h.b16 %v1341
  %v1636 = vunpack.c.l.b16 %v1342
  %v1637 = vunpack.c.h.b16 %v1342
  %v1638 = vunpack.c.l.b16 %v1343
  %v1639 = vunpack.c.h.b16 %v1343
  %v1640 = vunpack.c.l.b16 %v1344
  %v1641 = vunpack.c.l.b16 %v1345
  %v1642 = vunpack.c.h.b16 %v1345
  %v1643 = vunpack.c.l.b16 %v1346
  %v1644 = vunpack.c.h.b16 %v1346
  %v1645 = vunpack.c.l.b16 %v1347
  %v1646 = vunpack.c.h.b16 %v1347
  %v1647 = vunpack.c.l.b16 %v1348
  %v1648 = vunpack.c.l.b16 %v1349
  %v1649 = vunpack.c.h.b16 %v1349
  %v1650 = vunpack.c.l.b16 %v1350
  %v1651 = vunpack.c.h.b16 %v1350
  %v1652 = vunpack.c.l.b16 %v1351
  %v1653 = vunpack.c.h.b16 %v1351
  %v1654 = vunpack.c.l.b16 %v1352
  %v1655 = vunpack.c.l.b16 %v1353
  %v1656 = vunpack.c.h.b16 %v1353
  %v1657 = vunpack.c.l.b16 %v1354
  %v1658 = vunpack.c.h.b16 %v1354
  %v1659 = vunpack.c.l.b16 %v1355
  %v1660 = vunpack.c.h.b16 %v1355
  %v1661 = vunpack.c.l.b16 %v1356
  %v1662 = vunpack.c.l.b16 %v1357
  %v1663 = vunpack.c.h.b16 %v1357
  %v1664 = vunpack.c.l.b16 %v1358
  %v1665 = vunpack.c.h.b16 %v1358
  %v1666 = vunpack.c.l.b16 %v1359
  %v1667 = vunpack.c.h.b16 %v1359
  %v1668 = vunpack.c.l.b16 %v1360
  %v1669 = vunpack.c.l.b16 %v1361
  %v1670 = vunpack.c.h.b16 %v1361
  %v1671 = vunpack.c.l.b16 %v1362
  %v1672 = vunpack.c.h.b16 %v1362
  %v1673 = vunpack.c.l.b16 %v1363
  %v1674 = vunpack.c.h.b16 %v1363
  %v1675 = vunpack.c.l.b16 %v1364
  %v1676 = vunpack.c.l.b16 %v1365
  %v1677 = vunpack.c.h.b16 %v1365
  %v1678 = vunpack.c.l.b16 %v1366
  %v1679 = vunpack.c.h.b16 %v1366
  %v1680 = vunpack.c.l.b16 %v1367
  %v1681 = vunpack.c.h.b16 %v1367
  %v1682 = vunpack.c.l.b16 %v1368
  %v1683 = vunpack.c.l.b16 %v1369
  %v1684 = vunpack.c.h.b16 %v1369
  %v1685 = vunpack.c.l.b16 %v1370
  %v1686 = vunpack.c.h.b16 %v1370
  %v1687 = vunpack.c.l.b16 %v1371
  %v1688 = vunpack.c.h.b16 %v1371
  %v1689 = vunpack.c.l.b16 %v1372
  %v1690 = vunpack.c.l.b16 %v1373
  %v1691 = vunpack.c.h.b16 %v1373
  %v1692 = vunpack.c.l.b16 %v1374
  %v1693 = vunpack.c.h.b16 %v1374
  %v1694 = vunpack.c.l.b16 %v1375
  %v1695 = vunpack.c.h.b16 %v1375
  %v1696 = vunpack.c.l.b16 %v1376
  %v1697 = vunpack.c.l.b16 %v1377
  %v1698 = vunpack.c.h.b16 %v1377
  %v1699 = vunpack.c.l.b16 %v1378
  %v1700 = vunpack.c.h.b16 %v1378
  %v1701 = vunpack.c.l.b16 %v1379
  %v1702 = vunpack.c.h.b16 %v1379
  %v1703 = vunpack.c.l.b16 %v1380
  %v1704 = vunpack.c.l.b16 %v1381
  %v1705 = vunpack.c.h.b16 %v1381
  %v1706 = vunpack.c.l.b16 %v1382
  %v1707 = vunpack.c.h.b16 %v1382
  %v1708 = vunpack.c.l.b16 %v1383
  %v1709 = vunpack.c.h.b16 %v1383
  %v1710 = vunpack.c.l.b16 %v1384
  %v1711 = vunpack.c.l.b16 %v1385
  %v1712 = vunpack.c.h.b16 %v1385
  %v1713 = vunpack.c.l.b16 %v1386
  %v1714 = vunpack.c.h.b16 %v1386
  %v1715 = vunpack.c.l.b16 %v1387
  %v1716 = vunpack.c.h.b16 %v1387
  %v1717 = vunpack.c.l.b16 %v1388
  %v1718 = vunpack.c.l.b16 %v1389
  %v1719 = vunpack.c.h.b16 %v1389
  %v1720 = vunpack.c.l.b16 %v1390
  %v1721 = vunpack.c.h.b16 %v1390
  %v1722 = vunpack.c.l.b16 %v1391
  %v1723 = vunpack.c.h.b16 %v1391
  %v1724 = vunpack.c.l.b16 %v1392
  %v1725 = vunpack.c.l.b16 %v1393
  %v1726 = vunpack.c.h.b16 %v1393
  %v1727 = vunpack.c.l.b16 %v1394
  %v1728 = vunpack.c.h.b16 %v1394
  %v1729 = vunpack.c.l.b16 %v1395
  %v1730 = vunpack.c.h.b16 %v1395
  %v1731 = vunpack.c.l.b16 %v1396
  %v1732 = vunpack.c.l.b16 %v1397
  %v1733 = vunpack.c.h.b16 %v1397
  %v1734 = vunpack.c.l.b16 %v1398
  %v1735 = vunpack.c.h.b16 %v1398
  %v1736 = vunpack.c.l.b16 %v1399
  %v1737 = vunpack.c.h.b16 %v1399
  %v1738 = vunpack.c.l.b16 %v1400
  %v1739 = vunpack.c.l.b16 %v1401
  %v1740 = vunpack.c.h.b16 %v1401
  %v1741 = vunpack.c.l.b16 %v1402
  %v1742 = vunpack.c.h.b16 %v1402
  %v1743 = vunpack.c.l.b16 %v1403
  %v1744 = vunpack.c.h.b16 %v1403
  %v1745 = vunpack.c.l.b16 %v1404
  %v1746 = vunpack.c.l.b16 %v1405
  %v1747 = vunpack.c.h.b16 %v1405
  %v1748 = vunpack.c.l.b16 %v1406
  %v1749 = vunpack.c.h.b16 %v1406
  %v1750 = vunpack.c.l.b16 %v1407
  %v1751 = vunpack.c.h.b16 %v1407
  %v1752 = vunpack.c.l.b16 %v1408
  %v1753 = vunpack.c.l.b16 %v1409
  %v1754 = vunpack.c.h.b16 %v1409
  %v1755 = vunpack.c.l.b16 %v1410
  %v1756 = vunpack.c.h.b16 %v1410
  %v1757 = vunpack.c.l.b16 %v1411
  %v1758 = vunpack.c.h.b16 %v1411
  %v1759 = vunpack.c.l.b16 %v1412
  %v1760 = vunpack.c.l.b16 %v1413
  %v1761 = vunpack.c.h.b16 %v1413
  %v1762 = vunpack.c.l.b16 %v1414
  %v1763 = vunpack.c.h.b16 %v1414
  %v1764 = vunpack.c.l.b16 %v1415
  %v1765 = vunpack.c.h.b16 %v1415
  %v1766 = vunpack.c.l.b16 %v1416
  %v1767 = vunpack.c.l.b16 %v1417
  %v1768 = vunpack.c.h.b16 %v1417
  %v1769 = vunpack.c.l.b16 %v1418
  %v1770 = vunpack.c.h.b16 %v1418
  %v1771 = vunpack.c.l.b16 %v1419
  %v1772 = vunpack.c.h.b16 %v1419
  %v1773 = vunpack.c.l.b16 %v1420
  %v1774 = vunpack.c.l.b16 %v1421
  %v1775 = vunpack.c.h.b16 %v1421
  %v1776 = vunpack.c.l.b16 %v1422
  %v1777 = vunpack.c.h.b16 %v1422
  %v1778 = vunpack.c.l.b16 %v1423
  %v1779 = vunpack.c.h.b16 %v1423
  %v1780 = vunpack.c.l.b16 %v1424
  %v1781 = vunpack.c.l.b16 %v1425
  %v1782 = vunpack.c.h.b16 %v1425
  %v1783 = vunpack.c.l.b16 %v1426
  %v1784 = vunpack.c.h.b16 %v1426
  %v1785 = vunpack.c.l.b16 %v1427
  %v1786 = vunpack.c.h.b16 %v1427
  %v1787 = vunpack.c.l.b16 %v1428
  %v1788 = vunpack.c.l.b16 %v1429
  %v1789 = vunpack.c.h.b16 %v1429
  %v1790 = vunpack.c.l.b16 %v1430
  %v1791 = vunpack.c.h.b16 %v1430
  %v1792 = vunpack.c.l.b16 %v1431
  %v1793 = vunpack.c.h.b16 %v1431
  %v1794 = vunpack.c.l.b16 %v1432
  %v1795 = vunpack.c.l.b16 %v1433
  %v1796 = vunpack.c.h.b16 %v1433
  %v1797 = vunpack.c.l.b16 %v1434
  %v1798 = vunpack.c.h.b16 %v1434
  %v1799 = vunpack.c.l.b16 %v1435
  %v1800 = vunpack.c.h.b16 %v1435
  %v1801 = vunpack.c.l.b16 %v1436
  %v1802 = vunpack.c.l.b16 %v1437
  %v1803 = vunpack.c.h.b16 %v1437
  %v1804 = vunpack.c.l.b16 %v1438
  %v1805 = vunpack.c.h.b16 %v1438
  %v1806 = vunpack.c.l.b16 %v1439
  %v1807 = vunpack.c.h.b16 %v1439
  %v1808 = vunpack.c.l.b16 %v1440
  %v1809 = vunpack.c.l.b16 %v1441
  %v1810 = vunpack.c.h.b16 %v1441
  %v1811 = vunpack.c.l.b16 %v1442
  %v1812 = vunpack.c.h.b16 %v1442
  %v1813 = vunpack.c.l.b16 %v1443
  %v1814 = vunpack.c.h.b16 %v1443
  %v1815 = vunpack.c.l.b16 %v1444
  %v1816 = vunpack.c.l.b16 %v1445
  %v1817 = vunpack.c.h.b16 %v1445
  %v1818 = vunpack.c.l.b16 %v1446
  %v1819 = vunpack.c.h.b16 %v1446
  %v1820 = vunpack.c.l.b16 %v1447
  %v1821 = vunpack.c.h.b16 %v1447
  %v1822 = vunpack.c.l.b16 %v1448
  %v1823 = vunpack.c.l.b16 %v1449
  %v1824 = vunpack.c.h.b16 %v1449
  %v1825 = vunpack.c.l.b16 %v1450
  %v1826 = vunpack.c.h.b16 %v1450
  %v1827 = vunpack.c.l.b16 %v1451
  %v1828 = vunpack.c.h.b16 %v1451
  %v1829 = vunpack.c.l.b16 %v1452
  %v1830 = vunpack.c.l.b16 %v1453
  %v1831 = vunpack.c.h.b16 %v1453
  %v1832 = vunpack.c.l.b16 %v1454
  %v1833 = vunpack.c.h.b16 %v1454
  %v1834 = vunpack.c.l.b16 %v1455
  %v1835 = vunpack.c.h.b16 %v1455
  %v1836 = vunpack.c.l.b16 %v1456
  %v1837 = vunpack.c.l.b16 %v1457
  %v1838 = vunpack.c.h.b16 %v1457
  %v1839 = vunpack.c.l.b16 %v1458
  %v1840 = vunpack.c.h.b16 %v1458
  %v1841 = vunpack.c.l.b16 %v1459
  %v1842 = vunpack.c.h.b16 %v1459
  %v1843 = vunpack.c.l.b16 %v1460
  %v1844 = vunpack.c.l.b16 %v1461
  %v1845 = vunpack.c.h.b16 %v1461
  %v1846 = vunpack.c.l.b16 %v1462
  %v1847 = vunpack.c.h.b16 %v1462
  %v1848 = vunpack.c.l.b16 %v1463
  %v1849 = vunpack.c.h.b16 %v1463
  %v1850 = vunpack.c.l.b16 %v1464
  %v1851 = vunpack.c.l.b16 %v1465
  %v1852 = vunpack.c.h.b16 %v1465
  %v1853 = vunpack.c.l.b16 %v1466
  %v1854 = vunpack.c.h.b16 %v1466
  %v1855 = vunpack.c.l.b16 %v1467
  %v1856 = vunpack.c.h.b16 %v1467
  %v1857 = vunpack.c.l.b16 %v1468
  %v1858 = vpack.c.b16 %v1641, %v1634
  %v1859 = vpack.c.b16 %v1642, %v1635
  %v1860 = vpack.c.b16 %v1643, %v1636
  %v1861 = vpack.c.b16 %v1644, %v1637
  %v1862 = vpack.c.b16 %v1645, %v1638
  %v1863 = vpack.c.b16 %v1646, %v1639
  %v1864 = vpack.c.b16 %v1647, %v1640
  %v1865 = vpack.c.b16 %v1655, %v1648
  %v1866 = vpack.c.b16 %v1656, %v1649
  %v1867 = vpack.c.b16 %v1657, %v1650
  %v1868 = vpack.c.b16 %v1658, %v1651
  %v1869 = vpack.c.b16 %v1659, %v1652
  %v1870 = vpack.c.b16 %v1660, %v1653
  %v1871 = vpack.c.b16 %v1661, %v1654
  %v1872 = vpack.c.b16 %v1669, %v1662
  %v1873 = vpack.c.b16 %v1670, %v1663
  %v1874 = vpack.c.b16 %v1671, %v1664
  %v1875 = vpack.c.b16 %v1672, %v1665
  %v1876 = vpack.c.b16 %v1673, %v1666
  %v1877 = vpack.c.b16 %v1674, %v1667
  %v1878 = vpack.c.b16 %v1675, %v1668
  %v1879 = vpack.c.b16 %v1683, %v1676
  %v1880 = vpack.c.b16 %v1684, %v1677
  %v1881 = vpack.c.b16 %v1685, %v1678
  %v1882 = vpack.c.b16 %v1686, %v1679
  %v1883 = vpack.c.b16 %v1687, %v1680
  %v1884 = vpack.c.b16 %v1688, %v1681
  %v1885 = vpack.c.b16 %v1689, %v1682
  %v1886 = vpack.c.b16 %v1697, %v1690
  %v1887 = vpack.c.b16 %v1698, %v1691
  %v1888 = vpack.c.b16 %v1699, %v1692
  %v1889 = vpack.c.b16 %v1700, %v1693
  %v1890 = vpack.c.b16 %v1701, %v1694
  %v1891 = vpack.c.b16 %v1702, %v1695
  %v1892 = vpack.c.b16 %v1703, %v1696
  %v1893 = vpack.c.b16 %v1711, %v1704
  %v1894 = vpack.c.b16 %v1712, %v1705
  %v1895 = vpack.c.b16 %v1713, %v1706
  %v1896 = vpack.c.b16 %v1714, %v1707
  %v1897 = vpack.c.b16 %v1715, %v1708
  %v1898 = vpack.c.b16 %v1716, %v1709
  %v1899 = vpack.c.b16 %v1717, %v1710
  %v1900 = vpack.c.b16 %v1725, %v1718
  %v1901 = vpack.c.b16 %v1726, %v1719
  %v1902 = vpack.c.b16 %v1727, %v1720
  %v1903 = vpack.c.b16 %v1728, %v1721
  %v1904 = vpack.c.b16 %v1729, %v1722
  %v1905 = vpack.c.b16 %v1730, %v1723
  %v1906 = vpack.c.b16 %v1731, %v1724
  %v1907 = vpack.c.b16 %v1739, %v1732
  %v1908 = vpack.c.b16 %v1740, %v1733
  %v1909 = vpack.c.b16 %v1741, %v1734
  %v1910 = vpack.c.b16 %v1742, %v1735
  %v1911 = vpack.c.b16 %v1743, %v1736
  %v1912 = vpack.c.b16 %v1744, %v1737
  %v1913 = vpack.c.b16 %v1745, %v1738
  %v1914 = vpack.c.b16 %v1753, %v1746
  %v1915 = vpack.c.b16 %v1754, %v1747
  %v1916 = vpack.c.b16 %v1755, %v1748
  %v1917 = vpack.c.b16 %v1756, %v1749
  %v1918 = vpack.c.b16 %v1757, %v1750
  %v1919 = vpack.c.b16 %v1758, %v1751
  %v1920 = vpack.c.b16 %v1759, %v1752
  %v1921 = vpack.c.b16 %v1767, %v1760
  %v1922 = vpack.c.b16 %v1768, %v1761
  %v1923 = vpack.c.b16 %v1769, %v1762
  %v1924 = vpack.c.b16 %v1770, %v1763
  %v1925 = vpack.c.b16 %v1771, %v1764
  %v1926 = vpack.c.b16 %v1772, %v1765
  %v1927 = vpack.c.b16 %v1773, %v1766
  %v1928 = vpack.c.b16 %v1781, %v1774
  %v1929 = vpack.c.b16 %v1782, %v1775
  %v1930 = vpack.c.b16 %v1783, %v1776
  %v1931 = vpack.c.b16 %v1784, %v1777
  %v1932 = vpack.c.b16 %v1785, %v1778
  %v1933 = vpack.c.b16 %v1786, %v1779
  %v1934 = vpack.c.b16 %v1787, %v1780
  %v1935 = vpack.c.b16 %v1795, %v1788
  %v1936 = vpack.c.b16 %v1796, %v1789
  %v1937 = vpack.c.b16 %v1797, %v1790
  %v1938 = vpack.c.b16 %v1798, %v1791
  %v1939 = vpack.c.b16 %v1799, %v1792
  %v1940 = vpack.c.b16 %v1800, %v1793
  %v1941 = vpack.c.b16 %v1801, %v1794
  %v1942 = vpack.c.b16 %v1809, %v1802
  %v1943 = vpack.c.b16 %v1810, %v1803
  %v1944 = vpack.c.b16 %v1811, %v1804
  %v1945 = vpack.c.b16 %v1812, %v1805
  %v1946 = vpack.c.b16 %v1813, %v1806
  %v1947 = vpack.c.b16 %v1814, %v1807
  %v1948 = vpack.c.b16 %v1815, %v1808
  %v1949 = vpack.c.b16 %v1823, %v1816
  %v1950 = vpack.c.b16 %v1824, %v1817
  %v1951 = vpack.c.b16 %v1825, %v1818
  %v1952 = vpack.c.b16 %v1826, %v1819
  %v1953 = vpack.c.b16 %v1827, %v1820
  %v1954 = vpack.c.b16 %v1828, %v1821
  %v1955 = vpack.c.b16 %v1829, %v1822
  %v1956 = vpack.c.b16 %v1837, %v1830
  %v1957 = vpack.c.b16 %v1838, %v1831
  %v1958 = vpack.c.b16 %v1839, %v1832
  %v1959 = vpack.c.b16 %v1840, %v1833
  %v1960 = vpack.c.b16 %v1841, %v1834
  %v1961 = vpack.c.b16 %v1842, %v1835
  %v1962 = vpack.c.b16 %v1843, %v1836
  %v1963 = vpack.c.b16 %v1851, %v1844
  %v1964 = vpack.c.b16 %v1852, %v1845
  %v1965 = vpack.c.b16 %v1853, %v1846
  %v1966 = vpack.c.b16 %v1854, %v1847
  %v1967 = vpack.c.b16 %v1855, %v1848
  %v1968 = vpack.c.b16 %v1856, %v1849
  %v1969 = vpack.c.b16 %v1857, %v1850
  %2082 = vmatprep.subr.bf16.mxu0 %v1908
  %2083 = vmatpush1.bf16.msra.mxu0 %v1907
  %2084 = vmatprep.subr.bf16.mxu0 %v1901
  %2085 = vmatpush1.bf16.msra.mxu0 %v1900
  %2086 = vmatprep.subr.bf16.mxu0 %v1894
  %2087 = vmatpush1.bf16.msra.mxu0 %v1893
  %2088 = vmatprep.subr.bf16.mxu0 %v1887
  %2089 = vmatpush1.bf16.msra.mxu0 %v1886
  %2090 = vmatprep.subr.bf16.mxu0 %v1880
  %2091 = vmatpush1.bf16.msra.mxu0 %v1879
  %2092 = vmatprep.subr.bf16.mxu0 %v1873
  %2093 = vmatpush1.bf16.msra.mxu0 %v1872
  %2094 = vmatprep.subr.bf16.mxu0 %v1866
  %2095 = vmatpush1.bf16.msra.mxu0 %v1865
  %2096 = vmatprep.subr.bf16.mxu0 %v1859
  %2097 = vmatpush1.bf16.msra.mxu0 %v1858
  %2098 = vmatprep.subr.bf16.mxu0 %v1964
  %2099 = vmatpush2.bf16.msra.mxu0 %v1963
  %2100 = vmatprep.subr.bf16.mxu0 %v1957
  %2101 = vmatpush2.bf16.msra.mxu0 %v1956
  %2102 = vmatprep.subr.bf16.mxu0 %v1950
  %2103 = vmatpush2.bf16.msra.mxu0 %v1949
  %2104 = vmatprep.subr.bf16.mxu0 %v1943
  %2105 = vmatpush2.bf16.msra.mxu0 %v1942
  %2106 = vmatprep.subr.bf16.mxu0 %v1936
  %2107 = vmatpush2.bf16.msra.mxu0 %v1935
  %2108 = vmatprep.subr.bf16.mxu0 %v1929
  %2109 = vmatpush2.bf16.msra.mxu0 %v1928
  %2110 = vmatprep.subr.bf16.mxu0 %v1922
  %2111 = vmatpush2.bf16.msra.mxu0 %v1921
  %2112 = vmatprep.subr.bf16.mxu0 %v1915
  %2113 = vmatpush2.bf16.msra.mxu0 %v1914
  %2114 = vmatprep.mubr.bf16.mxu0 %v1340
  %2115 = vmatmul.mubr.bf16.gmra.mxu0 %v1339
  %v2116 = vpop.f32.mrf.mxu0
  %v2117 = vadd.f32 %v1474, %v2116
  %v2118 = vpop.f32.mrf.mxu0
  %v2119 = vadd.f32 %v1478, %v2118
  %v2120 = vpop.f32.mrf.mxu0
  %v2121 = vadd.f32 %v1474, %v2120
  %v2122 = vpop.f32.mrf.mxu0
  %v2123 = vadd.f32 %v1478, %v2122
  %2124 = vdwg.mxu0
  %2125 = vmatprep.subr.bf16.mxu0 %v1910
  %2126 = vmatpush1.bf16.msra.mxu0 %v1909
  %2127 = vmatprep.subr.bf16.mxu0 %v1903
  %2128 = vmatpush1.bf16.msra.mxu0 %v1902
  %2129 = vmatprep.subr.bf16.mxu0 %v1896
  %2130 = vmatpush1.bf16.msra.mxu0 %v1895
  %2131 = vmatprep.subr.bf16.mxu0 %v1889
  %2132 = vmatpush1.bf16.msra.mxu0 %v1888
  %2133 = vmatprep.subr.bf16.mxu0 %v1882
  %2134 = vmatpush1.bf16.msra.mxu0 %v1881
  %2135 = vmatprep.subr.bf16.mxu0 %v1875
  %2136 = vmatpush1.bf16.msra.mxu0 %v1874
  %2137 = vmatprep.subr.bf16.mxu0 %v1868
  %2138 = vmatpush1.bf16.msra.mxu0 %v1867
  %2139 = vmatprep.subr.bf16.mxu0 %v1861
  %2140 = vmatpush1.bf16.msra.mxu0 %v1860
  %2141 = vmatprep.subr.bf16.mxu0 %v1966
  %2142 = vmatpush2.bf16.msra.mxu0 %v1965
  %2143 = vmatprep.subr.bf16.mxu0 %v1959
  %2144 = vmatpush2.bf16.msra.mxu0 %v1958
  %2145 = vmatprep.subr.bf16.mxu0 %v1952
  %2146 = vmatpush2.bf16.msra.mxu0 %v1951
  %2147 = vmatprep.subr.bf16.mxu0 %v1945
  %2148 = vmatpush2.bf16.msra.mxu0 %v1944
  %2149 = vmatprep.subr.bf16.mxu0 %v1938
  %2150 = vmatpush2.bf16.msra.mxu0 %v1937
  %2151 = vmatprep.subr.bf16.mxu0 %v1931
  %2152 = vmatpush2.bf16.msra.mxu0 %v1930
  %2153 = vmatprep.subr.bf16.mxu0 %v1924
  %2154 = vmatpush2.bf16.msra.mxu0 %v1923
  %2155 = vmatprep.subr.bf16.mxu0 %v1917
  %2156 = vmatpush2.bf16.msra.mxu0 %v1916
  %2157 = vmatprep.mubr.bf16.mxu0 %v1340
  %2158 = vmatmul.mubr.bf16.gmra.mxu0 %v1339
  %v2159 = vpop.f32.mrf.mxu0
  %v2160 = vadd.f32 %v1482, %v2159
  %v2161 = vpop.f32.mrf.mxu0
  %v2162 = vadd.f32 %v1486, %v2161
  %v2163 = vpop.f32.mrf.mxu0
  %v2164 = vadd.f32 %v1482, %v2163
  %v2165 = vpop.f32.mrf.mxu0
  %v2166 = vadd.f32 %v1486, %v2165
  %2167 = vdwg.mxu0
  %2168 = vmatprep.subr.bf16.mxu0 %v1912
  %2169 = vmatpush1.bf16.msra.mxu0 %v1911
  %2170 = vmatprep.subr.bf16.mxu0 %v1905
  %2171 = vmatpush1.bf16.msra.mxu0 %v1904
  %2172 = vmatprep.subr.bf16.mxu0 %v1898
  %2173 = vmatpush1.bf16.msra.mxu0 %v1897
  %2174 = vmatprep.subr.bf16.mxu0 %v1891
  %2175 = vmatpush1.bf16.msra.mxu0 %v1890
  %2176 = vmatprep.subr.bf16.mxu0 %v1884
  %2177 = vmatpush1.bf16.msra.mxu0 %v1883
  %2178 = vmatprep.subr.bf16.mxu0 %v1877
  %2179 = vmatpush1.bf16.msra.mxu0 %v1876
  %2180 = vmatprep.subr.bf16.mxu0 %v1870
  %2181 = vmatpush1.bf16.msra.mxu0 %v1869
  %2182 = vmatprep.subr.bf16.mxu0 %v1863
  %2183 = vmatpush1.bf16.msra.mxu0 %v1862
  %2184 = vmatprep.subr.bf16.mxu0 %v1968
  %2185 = vmatpush2.bf16.msra.mxu0 %v1967
  %2186 = vmatprep.subr.bf16.mxu0 %v1961
  %2187 = vmatpush2.bf16.msra.mxu0 %v1960
  %2188 = vmatprep.subr.bf16.mxu0 %v1954
  %2189 = vmatpush2.bf16.msra.mxu0 %v1953
  %2190 = vmatprep.subr.bf16.mxu0 %v1947
  %2191 = vmatpush2.bf16.msra.mxu0 %v1946
  %2192 = vmatprep.subr.bf16.mxu0 %v1940
  %2193 = vmatpush2.bf16.msra.mxu0 %v1939
  %2194 = vmatprep.subr.bf16.mxu0 %v1933
  %2195 = vmatpush2.bf16.msra.mxu0 %v1932
  %2196 = vmatprep.subr.bf16.mxu0 %v1926
  %2197 = vmatpush2.bf16.msra.mxu0 %v1925
  %2198 = vmatprep.subr.bf16.mxu0 %v1919
  %2199 = vmatpush2.bf16.msra.mxu0 %v1918
  %2200 = vmatprep.mubr.bf16.mxu0 %v1340
  %2201 = vmatmul.mubr.bf16.gmra.mxu0 %v1339
  %v2202 = vpop.f32.mrf.mxu0
  %v2203 = vadd.f32 %v1490, %v2202
  %v2204 = vpop.f32.mrf.mxu0
  %v2205 = vadd.f32 %v1494, %v2204
  %v2206 = vpop.f32.mrf.mxu0
  %v2207 = vadd.f32 %v1490, %v2206
  %v2208 = vpop.f32.mrf.mxu0
  %v2209 = vadd.f32 %v1494, %v2208
  %2210 = vdwg.mxu0
  %2211 = vmatprep.subr.bf16.mxu0 0
  %2212 = vmatpush1.bf16.msra.mxu0 %v1913
  %2213 = vmatprep.subr.bf16.mxu0 0
  %2214 = vmatpush1.bf16.msra.mxu0 %v1906
  %2215 = vmatprep.subr.bf16.mxu0 0
  %2216 = vmatpush1.bf16.msra.mxu0 %v1899
  %2217 = vmatprep.subr.bf16.mxu0 0
  %2218 = vmatpush1.bf16.msra.mxu0 %v1892
  %2219 = vmatprep.subr.bf16.mxu0 0
  %2220 = vmatpush1.bf16.msra.mxu0 %v1885
  %2221 = vmatprep.subr.bf16.mxu0 0
  %2222 = vmatpush1.bf16.msra.mxu0 %v1878
  %2223 = vmatprep.subr.bf16.mxu0 0
  %2224 = vmatpush1.bf16.msra.mxu0 %v1871
  %2225 = vmatprep.subr.bf16.mxu0 0
  %2226 = vmatpush1.bf16.msra.mxu0 %v1864
  %2227 = vmatprep.subr.bf16.mxu0 0
  %2228 = vmatpush2.bf16.msra.mxu0 %v1969
  %2229 = vmatprep.subr.bf16.mxu0 0
  %2230 = vmatpush2.bf16.msra.mxu0 %v1962
  %2231 = vmatprep.subr.bf16.mxu0 0
  %2232 = vmatpush2.bf16.msra.mxu0 %v1955
  %2233 = vmatprep.subr.bf16.mxu0 0
  %2234 = vmatpush2.bf16.msra.mxu0 %v1948
  %2235 = vmatprep.subr.bf16.mxu0 0
  %2236 = vmatpush2.bf16.msra.mxu0 %v1941
  %2237 = vmatprep.subr.bf16.mxu0 0
  %2238 = vmatpush2.bf16.msra.mxu0 %v1934
  %2239 = vmatprep.subr.bf16.mxu0 0
  %2240 = vmatpush2.bf16.msra.mxu0 %v1927
  %2241 = vmatprep.subr.bf16.mxu0 0
  %2242 = vmatpush2.bf16.msra.mxu0 %v1920
  %2243 = vmatprep.mubr.bf16.mxu0 %v1340
  %2244 = vmatmul.mubr.bf16.gmra.mxu0 %v1339
  %v2245 = vpop.f32.mrf.mxu0
  %v2246 = vadd.f32 %v1498, %v2245
  %v2247 = vpop.f32.mrf.mxu0
  %v2248 = vpop.f32.mrf.mxu0
  %v2249 = vadd.f32 %v1498, %v2248
  %v2250 = vpop.f32.mrf.mxu0
  %2251 = vdwg.mxu0
  %v2252 = vsub.f32 0.0, %v2117
  %v2253 = vsub.f32 0.0, %v2119
  %v2254 = vsub.f32 0.0, %v2160
  %v2255 = vsub.f32 0.0, %v2162
  %v2256 = vsub.f32 0.0, %v2203
  %v2257 = vsub.f32 0.0, %v2205
  %v2258 = vsub.f32 0.0, %v2246
  %v2259 = vsub.f32 0.0, %v2121
  %v2260 = vsub.f32 0.0, %v2123
  %v2261 = vsub.f32 0.0, %v2164
  %v2262 = vsub.f32 0.0, %v2166
  %v2263 = vsub.f32 0.0, %v2207
  %v2264 = vsub.f32 0.0, %v2209
  %v2265 = vsub.f32 0.0, %v2249
  %v2266 = vmul.f32 %v2252, 1.442695
  %v2267 = vpow.pop %v2266
  %v2268 = vmul.f32 %v2253, 1.442695
  %v2269 = vpow.pop %v2268
  %v2270 = vmul.f32 %v2254, 1.442695
  %v2271 = vpow.pop %v2270
  %v2272 = vmul.f32 %v2255, 1.442695
  %v2273 = vpow.pop %v2272
  %v2274 = vmul.f32 %v2256, 1.442695
  %v2275 = vpow.pop %v2274
  %v2276 = vmul.f32 %v2257, 1.442695
  %v2277 = vpow.pop %v2276
  %v2278 = vmul.f32 %v2258, 1.442695
  %v2279 = vpow.pop %v2278
  %v2280 = vmul.f32 %v2259, 1.442695
  %v2281 = vpow.pop %v2280
  %v2282 = vmul.f32 %v2260, 1.442695
  %v2283 = vpow.pop %v2282
  %v2284 = vmul.f32 %v2261, 1.442695
  %v2285 = vpow.pop %v2284
  %v2286 = vmul.f32 %v2262, 1.442695
  %v2287 = vpow.pop %v2286
  %v2288 = vmul.f32 %v2263, 1.442695
  %v2289 = vpow.pop %v2288
  %v2290 = vmul.f32 %v2264, 1.442695
  %v2291 = vpow.pop %v2290
  %v2292 = vmul.f32 %v2265, 1.442695
  %v2293 = vpow.pop %v2292
  %v2294 = vadd.f32 %v2267, 1.0
  %v2295 = vadd.f32 %v2269, 1.0
  %v2296 = vadd.f32 %v2271, 1.0
  %v2297 = vadd.f32 %v2273, 1.0
  %v2298 = vadd.f32 %v2275, 1.0
  %v2299 = vadd.f32 %v2277, 1.0
  %v2300 = vadd.f32 %v2279, 1.0
  %v2301 = vadd.f32 %v2281, 1.0
  %v2302 = vadd.f32 %v2283, 1.0
  %v2303 = vadd.f32 %v2285, 1.0
  %v2304 = vadd.f32 %v2287, 1.0
  %v2305 = vadd.f32 %v2289, 1.0
  %v2306 = vadd.f32 %v2291, 1.0
  %v2307 = vadd.f32 %v2293, 1.0
  %v2308 = vrcp.pop %v2294
  %v2309 = vrcp.pop %v2295
  %v2310 = vrcp.pop %v2296
  %v2311 = vrcp.pop %v2297
  %v2312 = vrcp.pop %v2298
  %v2313 = vrcp.pop %v2299
  %v2314 = vrcp.pop %v2300
  %v2315 = vrcp.pop %v2301
  %v2316 = vrcp.pop %v2302
  %v2317 = vrcp.pop %v2303
  %v2318 = vrcp.pop %v2304
  %v2319 = vrcp.pop %v2305
  %v2320 = vrcp.pop %v2306
  %v2321 = vrcp.pop %v2307
  %v2322 = vpack.c.bf16 %v2315, %v2308
  %v2323 = vpack.c.bf16 %v2316, %v2309
  %v2324 = vpack.c.bf16 %v2317, %v2310
  %v2325 = vpack.c.bf16 %v2318, %v2311
  %v2326 = vpack.c.bf16 %v2319, %v2312
  %v2327 = vpack.c.bf16 %v2320, %v2313
  %v2328 = vpack.c.bf16 %v2321, %v2314
  %v2336 = vunpack.c.l.b16 %v2322
  %v2337 = vunpack.c.l.b16 %v2323
  %v2338 = vunpack.c.l.b16 %v2324
  %v2339 = vunpack.c.l.b16 %v2325
  %v2340 = vunpack.c.l.b16 %v2326
  %v2341 = vunpack.c.l.b16 %v2327
  %v2342 = vunpack.c.l.b16 %v2328
  %v2343 = vunpack.c.h.b16 %v2322
  %v2344 = vunpack.c.h.b16 %v2323
  %v2345 = vunpack.c.h.b16 %v2324
  %v2346 = vunpack.c.h.b16 %v2325
  %v2347 = vunpack.c.h.b16 %v2326
  %v2348 = vunpack.c.h.b16 %v2327
  %v2349 = vunpack.c.h.b16 %v2328
  %v2350 = vpack.c.b16 %v2337, %v2336
  %v2351 = vpack.c.b16 %v2339, %v2338
  %v2352 = vpack.c.b16 %v2341, %v2340
  %v2353 = vpack.c.b16 %v2342, %v2342
  %v2354 = vpack.c.b16 %v2344, %v2343
  %v2355 = vpack.c.b16 %v2346, %v2345
  %v2356 = vpack.c.b16 %v2348, %v2347
  %v2357 = vpack.c.b16 %v2349, %v2349
  %2366 = vst [vmem:[%s14] sm:$0xff] %v2350
  %2367 = vst [vmem:[%s14 + $0x8] sm:$0xff] %v2351
  %2368 = vst [vmem:[%s14 + $0x10] sm:$0xff] %v2352
  %vm2369 = vcmask 125952
  %2370 = vst.msk [vmem:[%s14 + $0x18] sm:$0xf] %vm2369, %v2353
  %2371 = vst [vmem:[%s14 + $0x1c] sm:$0xff] %v2354
  %2372 = vst [vmem:[%s14 + $0x24] sm:$0xff] %v2355
  %2373 = vst [vmem:[%s14 + $0x2c] sm:$0xff] %v2356
  %2374 = vst.msk [vmem:[%s14 + $0x34] sm:$0xf] %vm2369, %v2357
  %v2375 = vmul.f32 %v1138, %v1138
  %v2376 = vmul.f32 %v1139, %v1139
  %2379 = vrot.lane.b32.xlu0 %v2375, 118
  %v2380 = vpop.permute.xlu0 %2379
  %2381 = vrot.lane.b32.xlu0 %v2376, 118
  %v2382 = vpop.permute.xlu0 %2381
  %v2385 = vadd.f32 %v2375, %v2380
  %v2386 = vadd.f32 %v2376, %v2382
  %v2387 = vadd.f32 %v2375, 1e-08
  %v2388 = vadd.f32 %v2376, 1e-08
  %v2389 = vlog2.pop %v2387
  %v2390 = vmul.f32 %v2389, 0.6931472
  %v2391 = vlog2.pop %v2388
  %v2392 = vmul.f32 %v2391, 0.6931472
  %2395 = vrot.lane.b32.xlu0 %v2390, 118
  %v2396 = vpop.permute.xlu0 %2395
  %2397 = vrot.lane.b32.xlu0 %v2392, 118
  %v2398 = vpop.permute.xlu0 %2397
  %v2401 = vsub.f32 %v2385, %v2396
  %v2402 = vsub.f32 %v2386, %v2398
  %v2403 = vsub.f32 %v2401, 1.0
  %v2404 = vsub.f32 %v2402, 1.0
  %v2405 = vsel %vm1177, %v2403, 0.0
  %2406 = vadd.xlane.f32.xlu0 %v2405
  %v2407 = vpop.xlane.xlu0 %2406
  %v2408 = vsel %vm1177, %v2404, 0.0
  %2409 = vadd.xlane.f32.xlu0 %v2408
  %v2410 = vpop.xlane.xlu0 %2409
  %vm2411 = vcmask 7168
  %2412 = vst.msk [vmem:[%s15] sm:$0xff] %vm2411, %v2407
  %2413 = vst.msk [vmem:[%s15 + $0x8] sm:$0xff] %vm2411, %v2410
  // Predicated region
  $region58: #{vae_forward.1} parent=0 // pred_check
    _
  $region59: #{vae_forward.1} parent=0 // pred_check_branch
    %2415 = sbr.rel (0) target = $region61
  $region60: #{vae_forward.1} parent=0 // pred_region
    _
  $region61: #{vae_forward.1} parent=0 // pred_fallthru
    _
  // Predicated region
  $region62: #{vae_forward.1} parent=0 // pred_check
    _
  $region63: #{vae_forward.1} parent=0 // pred_check_branch
    %2417 = sbr.rel (0) target = $region65
  $region64: #{vae_forward.1} parent=0 // pred_region
    _
  $region65: #{vae_forward.1} parent=0 // pred_fallthru
    _
  // Predicated region
  $region66: #{vae_forward.1} parent=0 // pred_check
    _
  $region67: #{vae_forward.1} parent=0 // pred_check_branch
    %2419 = sbr.rel (0) target = $region69
  $region68: #{vae_forward.1} parent=0 // pred_region
    _
  $region69: #{vae_forward.1} parent=0 // pred_fallthru
    _
  // Predicated region
  $region70: #{vae_forward.1} parent=0 // pred_check
    _
  $region71: #{vae_forward.1} parent=0 // pred_check_branch
    %2421 = sbr.rel (0) target = $region73
  $region72: #{vae_forward.1} parent=0 // pred_region
    _
  $region73: #{vae_forward.1} parent=0 // pred_fallthru
    _

</llo_original>
